<compile_context>
chip_gen: v7x
topology: tpu7x:2x2x1
jax: 0.10.0
libtpu: 0.0.40
codegen_flags: <defaults>
</compile_context>

<pallas_src>
import functools

import numpy as np
import jax
import jax.numpy as jnp
from jax import lax
from jax.experimental import pallas as pl
from jax.experimental.pallas import tpu as pltpu

LANE = 128          # TPU lane width: pad all feature / rank dims into one 128-lane tile.
_LOG_ZERO = -1e30   # sentinel: exp(deg * _LOG_ZERO) underflows to exactly 0 (0/1 adjacency only).


# ------------------------------- Pallas kernel ---------------------------------
def _cp_layer(h, a, w_pack, b_pack, v_pack, w00, w01, w10, w11, f_out, rank, last):
    """One DGLGraphConv layer on lane-packed operands (f32, resident in VMEM/vregs).

    Lane layout of the packed payload (all within one 128-lane tile):
      [0, f_out)            feat_sum columns
      [f_out]               folded att2 logit column (s2 after aggregation)
      [c0, c1) = rank lanes log|tanh(h @ w_prod + b)|
      [c1, c2) = rank lanes (tanh < 0) sign indicator
    """
    c0 = f_out + 1
    c1 = c0 + rank
    c2 = c1 + rank

    # Single packed per-source dense matmul: h @ [w_sum | ws2 | w_prod].
    dense = jnp.dot(h, w_pack, preferred_element_type=jnp.float32)           # [Ns, LANE]
    t = jnp.tanh(dense + b_pack)                                             # prod lanes meaningful

    abs_t = jnp.abs(t)
    log_abs = jnp.where(abs_t > 0.0, jnp.log(abs_t), _LOG_ZERO)   # -inf from log(0) discarded here
    neg = (t < 0.0).astype(jnp.float32)
    neg_shift = pltpu.roll(neg, shift=rank, axis=1)               # move prod lanes [c0,c1) -> [c1,c2)

    lane_s = lax.broadcasted_iota(jnp.int32, dense.shape, 1)
    rhs = jnp.where(lane_s < c0, dense,
          jnp.where(lane_s < c1, log_abs,
          jnp.where(lane_s < c2, neg_shift, 0.0)))                           # [Ns, LANE] packed

    # Single 128-lane aggregation matmul over in-neighbors: A @ [feat_sum | log|t| | neg].
    agg = jnp.dot(a, rhs, preferred_element_type=jnp.float32)                # [Nd, LANE]

    lane_d = lax.broadcasted_iota(jnp.int32, agg.shape, 1)
    prod_mask = jnp.logical_and(lane_d >= c0, lane_d < c1)

    # Align neg-count lanes with log-sum lanes (XLU roll), then parity -> sign.
    neg_cnt = pltpu.roll(agg, shift=LANE - rank, axis=1)
    parity = neg_cnt - 2.0 * jnp.floor(neg_cnt * 0.5)
    sign = 1.0 - 2.0 * parity
    safe_log = jnp.where(prod_mask, agg, _LOG_ZERO)               # zero product outside prod lanes
    h_prod = sign * jnp.exp(safe_log)                                        # [Nd, LANE]

    # Rank-space -> output-space; v rows pre-shifted to [c0,c1); column f_out carries s1.
    prod_agg = jnp.dot(h_prod, v_pack, preferred_element_type=jnp.float32)   # [Nd, LANE]

    # Attention gate (att1/att2 logits already sit in lane f_out), softmax with T = 2.
    s1 = prod_agg[:, f_out:f_out + 1]
    s2 = agg[:, f_out:f_out + 1]
    g1 = jax.nn.sigmoid(s1)
    g2 = jax.nn.sigmoid(s2)
    z1 = (g1 * w00 + g2 * w01) * 0.5
    z2 = (g1 * w10 + g2 * w11) * 0.5
    m = jnp.maximum(z1, z2)
    e1 = jnp.exp(z1 - m)
    e2 = jnp.exp(z2 - m)
    inv = pl.reciprocal(e1 + e2, approx=True)   # EUP; ~1e-3 rel accuracy (documented tolerance)
    # Lanes >= c0 of `agg` carry finite log/neg junk; they feed zero weight rows next layer
    # and are sliced off the final output in the wrapper.
    out = (e1 * inv) * prod_agg + (e2 * inv) * agg
    if not last:
        out = jnp.maximum(out, 0.0)     # ReLU between layers; dropout = identity (eval)
    return out


def fused_cp_kernel(*refs, n_layers, f_outs, ranks):
    """Whole SampleCPPooling forward in one kernel; h stays on-chip across layers."""
    x_ref = refs[0]
    att_ref = refs[1 + 4 * n_layers]     # SMEM, flat [n_layers * 4]
    out_ref = refs[2 + 4 * n_layers]
    h = x_ref[...]
    for l in range(n_layers):
        a_ref, wpk_ref, bpk_ref, vpk_ref = refs[1 + 4 * l: 5 + 4 * l]
        a = a_ref[...].astype(jnp.float32)      # bf16 0/1 adjacency -> exact f32
        w00 = att_ref[4 * l + 0]
        w01 = att_ref[4 * l + 1]
        w10 = att_ref[4 * l + 2]
        w11 = att_ref[4 * l + 3]
        h = _cp_layer(h, a, wpk_ref[...], bpk_ref[...], vpk_ref[...],
                      w00, w01, w10, w11, f_outs[l], ranks[l],
                      last=(l == n_layers - 1))
    out_ref[...] = h


# --------------------------------- wrapper --------------------------------------
def _pad_layer_params(params):
    """Lane-pack weights into single [128,128] tiles and fold att1/att2 logits in."""
    w_sum, w_prod, b_prod, v, att1, att2, att_vec = params
    f_in, f_out = w_sum.shape
    rank = w_prod.shape[1]
    c0 = f_out + 1
    c1 = c0 + rank
    assert f_in <= LANE and c1 + rank <= LANE, "packed payload must fit one 128-lane tile"
    ws2 = (w_sum @ att2.T)[:, 0]    # [f_in]  -> s2 falls out of the aggregation matmul
    va1 = (v @ att1.T)[:, 0]        # [rank]  -> s1 falls out of the rank->out matmul
    # One packed dense weight: [w_sum | ws2 | w_prod] in columns.
    w_pack = (jnp.zeros((LANE, LANE), jnp.float32)
              .at[:f_in, :f_out].set(w_sum)
              .at[:f_in, f_out].set(ws2)
              .at[:f_in, c0:c1].set(w_prod))
    b_pack = jnp.zeros((1, LANE), jnp.float32).at[:, c0:c1].set(b_prod)
    # v rows pre-shifted to the log-sum lanes so the rank->out matmul reads agg in place.
    v_pack = (jnp.zeros((LANE, LANE), jnp.float32)
              .at[c0:c1, :f_out].set(v)
              .at[c0:c1, f_out].set(va1))
    return w_pack, b_pack, v_pack, att_vec.reshape(-1), f_out, rank


def sample_cp_pooling_forward(adjs, x, layer_params):
    """SampleCPPooling.forward: the whole layer stack as ONE fused pallas_call."""
    n_layers = len(layer_params)
    n_src, f_in0 = x.shape
    x_p = jnp.zeros((n_src, LANE), jnp.float32).at[:, :f_in0].set(x)

    inputs = [x_p]
    att_flats, f_outs, ranks = [], [], []
    for adj, params in zip(adjs, layer_params):
        w_pack, b_pack, v_pack, att_flat, f_out, rank = _pad_layer_params(params)
        # bf16 is exact for a 0/1 adjacency; halves HBM bytes / VMEM for the largest input.
        inputs += [adj.astype(jnp.bfloat16), w_pack, b_pack, v_pack]
        att_flats.append(att_flat)
        f_outs.append(f_out)
        ranks.append(rank)
    att_all = jnp.concatenate(att_flats).astype(jnp.float32)    # [n_layers * 4] -> SMEM

    n_dst_last = adjs[-1].shape[0]
    vmem = pl.BlockSpec(memory_space=pltpu.MemorySpace.VMEM)
    smem = pl.BlockSpec(memory_space=pltpu.MemorySpace.SMEM)
    kernel = functools.partial(fused_cp_kernel, n_layers=n_layers,
                               f_outs=tuple(f_outs), ranks=tuple(ranks))
    out_p = pl.pallas_call(
        kernel,
        out_shape=jax.ShapeDtypeStruct((n_dst_last, LANE), jnp.float32),
        in_specs=[vmem] * (1 + 4 * n_layers) + [smem],
        out_specs=vmem,
        compiler_params=pltpu.CompilerParams(vmem_limit_bytes=32 * 1024 * 1024),
    )(*inputs, att_all)
    return out_p[:, :f_outs[-1]]


# ------------------------- pure-JAX reference (sanity) -------------------------
def _ref_layer(h, a, params, apply_relu):
    w_sum, w_prod, b_prod, v, att1, att2, att_vec = params
    feat_sum = h @ w_sum
    t = jnp.tanh(h @ w_prod + b_prod)
    h_sum = a @ feat_sum
    masked = jnp.where(a[:, :, None] > 0, t[None, :, :], 1.0)
    h_prod = jnp.prod(masked, axis=1)
    prod_agg = h_prod @ v
    sum_agg = h_sum
    s1 = prod_agg @ att1.T
    s2 = sum_agg @ att2.T
    g = jax.nn.sigmoid(jnp.concatenate([s1, s2], axis=1))
    att = jax.nn.softmax((g @ att_vec.T) / 2.0, axis=1)
    out = att[:, 0:1] * prod_agg + att[:, 1:2] * sum_agg
    return jnp.maximum(out, 0.0) if apply_relu else out


def _ref_forward(adjs, x, layer_params):
    h = x
    n_layers = len(layer_params)
    for l, (adj, params) in enumerate(zip(adjs, layer_params)):
        h = _ref_layer(h, adj, params, l != n_layers - 1)
    return h


# ------------------------------- setup helpers ---------------------------------
def _xavier(key, shape):
    fan_in, fan_out = shape[0], shape[1]
    bound = float(np.sqrt(6.0 / (fan_in + fan_out)))
    return jax.random.uniform(key, shape, jnp.float32, -bound, bound)


def make_layer_params(key, f_in, f_out, rank):
    ks = jax.random.split(key, 6)
    w_prod_full = _xavier(ks[1], (f_in + 1, rank))        # nn.Parameter(in+1, rank)
    return (
        _xavier(ks[0], (f_in, f_out)),                    # weight_sum
        w_prod_full[:f_in, :],                            # weight_prod (main rows)
        w_prod_full[f_in:f_in + 1, :],                    # weight_prod (ones row -> bias)
        _xavier(ks[2], (rank, f_out)),                    # v
        _xavier(ks[3], (1, f_out)),                       # att1 weight
        _xavier(ks[4], (1, f_out)),                       # att2 weight
        _xavier(ks[5], (2, 2)),                           # att_vec weight
    )


def make_block_adj(key, n_dst, n_src, p=0.2):
    rand = (jax.random.uniform(key, (n_dst, n_src)) < p).astype(jnp.float32)
    self_edge = jnp.zeros((n_dst, n_src), jnp.float32).at[
        jnp.arange(n_dst), jnp.arange(n_dst)].set(1.0)      # guarantee in-degree >= 1
    return jnp.maximum(rand, self_edge)


if __name__ == "__main__":
    key = jax.random.PRNGKey(0)

    in_feats, n_hidden, n_rank, n_classes, n_layers = 16, 32, 8, 8, 3
    node_counts = [64, 32, 16, 8]                      # src/dst node counts per block
    dims = [in_feats] + [n_hidden] * (n_layers - 1) + [n_classes]

    key, kx = jax.random.split(key)
    x = jax.random.normal(kx, (node_counts[0], in_feats), jnp.float32)

    adjs, layer_params = [], []
    for l in range(n_layers):
        key, ka, kp = jax.random.split(key, 3)
        adjs.append(make_block_adj(ka, node_counts[l + 1], node_counts[l]))
        layer_params.append(make_layer_params(kp, dims[l], dims[l + 1], n_rank))

    out = sample_cp_pooling_forward(adjs, x, layer_params)
    out = jax.block_until_ready(out)

    ref = jax.block_until_ready(_ref_forward(adjs, x, layer_params))
    # Tolerance accommodates the approximate EUP reciprocal in the softmax denominator
    # (pl.reciprocal(approx=True), ~1e-3 relative).
    np.testing.assert_allclose(np.asarray(out), np.asarray(ref), rtol=2e-2, atol=2e-3)

    print("KERNEL_OK")
</pallas_src>

<mosaic_0001>
module attributes {stable_mosaic.version = 11 : i64} {
  func.func @fused_cp_kernel(%arg0: memref<64x128xf32, #tpu.memory_space<vmem>>, %arg1: memref<32x64xbf16, #tpu.memory_space<vmem>>, %arg2: memref<128x128xf32, #tpu.memory_space<vmem>>, %arg3: memref<1x128xf32, #tpu.memory_space<vmem>>, %arg4: memref<128x128xf32, #tpu.memory_space<vmem>>, %arg5: memref<16x32xbf16, #tpu.memory_space<vmem>>, %arg6: memref<128x128xf32, #tpu.memory_space<vmem>>, %arg7: memref<1x128xf32, #tpu.memory_space<vmem>>, %arg8: memref<128x128xf32, #tpu.memory_space<vmem>>, %arg9: memref<8x16xbf16, #tpu.memory_space<vmem>>, %arg10: memref<128x128xf32, #tpu.memory_space<vmem>>, %arg11: memref<1x128xf32, #tpu.memory_space<vmem>>, %arg12: memref<128x128xf32, #tpu.memory_space<vmem>>, %arg13: memref<12xf32, #tpu.memory_space<smem>>, %arg14: memref<8x128xf32, #tpu.memory_space<vmem>>) attributes {dimension_semantics = [], scalar_prefetch = 0 : i64, scratch_operands = 0 : i64, tpu.core_type = #tpu.core_type<tc>} {
    %c0 = arith.constant 0 : index
    %c0_0 = arith.constant 0 : index
    %0 = vector.load %arg0[%c0, %c0_0] : memref<64x128xf32, #tpu.memory_space<vmem>>, vector<64x128xf32>
    %c0_1 = arith.constant 0 : index
    %c0_2 = arith.constant 0 : index
    %1 = vector.load %arg1[%c0_1, %c0_2] : memref<32x64xbf16, #tpu.memory_space<vmem>>, vector<32x64xbf16>
    %2 = arith.extf %1 : vector<32x64xbf16> to vector<32x64xf32>
    %c0_3 = arith.constant 0 : index
    %3 = memref.load %arg13[%c0_3] : memref<12xf32, #tpu.memory_space<smem>>
    %c1 = arith.constant 1 : index
    %4 = memref.load %arg13[%c1] : memref<12xf32, #tpu.memory_space<smem>>
    %c2 = arith.constant 2 : index
    %5 = memref.load %arg13[%c2] : memref<12xf32, #tpu.memory_space<smem>>
    %c3 = arith.constant 3 : index
    %6 = memref.load %arg13[%c3] : memref<12xf32, #tpu.memory_space<smem>>
    %c0_4 = arith.constant 0 : index
    %c0_5 = arith.constant 0 : index
    %7 = vector.load %arg2[%c0_4, %c0_5] : memref<128x128xf32, #tpu.memory_space<vmem>>, vector<128x128xf32>
    %c0_6 = arith.constant 0 : index
    %c0_7 = arith.constant 0 : index
    %8 = vector.load %arg3[%c0_6, %c0_7] : memref<1x128xf32, #tpu.memory_space<vmem>>, vector<1x128xf32>
    %c0_8 = arith.constant 0 : index
    %c0_9 = arith.constant 0 : index
    %9 = vector.load %arg4[%c0_8, %c0_9] : memref<128x128xf32, #tpu.memory_space<vmem>>, vector<128x128xf32>
    %cst = arith.constant dense<0.000000e+00> : vector<64x128xf32>
    %10 = tpu.matmul %0, %7, %cst {dimension_numbers = #tpu.dot_dimension_numbers<[1], [0], [0], [1], [0, 0, 1, 1], [], []>} : vector<64x128xf32>, vector<128x128xf32>, vector<64x128xf32> -> vector<64x128xf32>
    %11 = vector.broadcast %8 : vector<1x128xf32> to vector<64x128xf32>
    %12 = arith.addf %10, %11 : vector<64x128xf32>
    %13 = math.tanh %12 : vector<64x128xf32>
    %14 = math.absf %13 : vector<64x128xf32>
    %cst_10 = arith.constant 0.000000e+00 : f32
    %15 = vector.broadcast %cst_10 : f32 to vector<64x128xf32>
    %16 = arith.cmpf ogt, %14, %15 : vector<64x128xf32>
    %17 = math.log %14 : vector<64x128xf32>
    %cst_11 = arith.constant -1.000000e+30 : f32
    %18 = vector.broadcast %cst_11 : f32 to vector<64x128xf32>
    %19 = arith.select %16, %17, %18 : vector<64x128xi1>, vector<64x128xf32>
    %cst_12 = arith.constant 0.000000e+00 : f32
    %20 = vector.broadcast %cst_12 : f32 to vector<64x128xf32>
    %21 = arith.cmpf olt, %13, %20 : vector<64x128xf32>
    %22 = arith.extui %21 : vector<64x128xi1> to vector<64x128xi32>
    %23 = arith.sitofp %22 : vector<64x128xi32> to vector<64x128xf32>
    %c8_i32 = arith.constant 8 : i32
    %24 = tpu.dynamic_rotate %23 by %c8_i32 dim 1 : vector<64x128xf32>, i32 -> vector<64x128xf32>
    %25 = tpu.iota {dimensions = array<i32: 1>} : vector<64x128xi32>
    %c33_i32 = arith.constant 33 : i32
    %26 = vector.broadcast %c33_i32 : i32 to vector<64x128xi32>
    %27 = arith.cmpi slt, %25, %26 : vector<64x128xi32>
    %c41_i32 = arith.constant 41 : i32
    %28 = vector.broadcast %c41_i32 : i32 to vector<64x128xi32>
    %29 = arith.cmpi slt, %25, %28 : vector<64x128xi32>
    %c49_i32 = arith.constant 49 : i32
    %30 = vector.broadcast %c49_i32 : i32 to vector<64x128xi32>
    %31 = arith.cmpi slt, %25, %30 : vector<64x128xi32>
    %cst_13 = arith.constant 0.000000e+00 : f32
    %32 = vector.broadcast %cst_13 : f32 to vector<64x128xf32>
    %33 = arith.select %31, %24, %32 : vector<64x128xi1>, vector<64x128xf32>
    %34 = arith.select %29, %19, %33 : vector<64x128xi1>, vector<64x128xf32>
    %35 = arith.select %27, %10, %34 : vector<64x128xi1>, vector<64x128xf32>
    %cst_14 = arith.constant dense<0.000000e+00> : vector<32x128xf32>
    %36 = tpu.matmul %2, %35, %cst_14 {dimension_numbers = #tpu.dot_dimension_numbers<[1], [0], [0], [1], [0, 0, 1, 1], [], []>} : vector<32x64xf32>, vector<64x128xf32>, vector<32x128xf32> -> vector<32x128xf32>
    %37 = tpu.iota {dimensions = array<i32: 1>} : vector<32x128xi32>
    %c33_i32_15 = arith.constant 33 : i32
    %38 = vector.broadcast %c33_i32_15 : i32 to vector<32x128xi32>
    %39 = arith.cmpi sge, %37, %38 : vector<32x128xi32>
    %c41_i32_16 = arith.constant 41 : i32
    %40 = vector.broadcast %c41_i32_16 : i32 to vector<32x128xi32>
    %41 = arith.cmpi slt, %37, %40 : vector<32x128xi32>
    %42 = arith.andi %39, %41 : vector<32x128xi1>
    %c120_i32 = arith.constant 120 : i32
    %43 = tpu.dynamic_rotate %36 by %c120_i32 dim 1 : vector<32x128xf32>, i32 -> vector<32x128xf32>
    %cst_17 = arith.constant 5.000000e-01 : f32
    %44 = vector.broadcast %cst_17 : f32 to vector<32x128xf32>
    %45 = arith.mulf %43, %44 : vector<32x128xf32>
    %46 = math.floor %45 : vector<32x128xf32>
    %cst_18 = arith.constant 2.000000e+00 : f32
    %47 = vector.broadcast %cst_18 : f32 to vector<32x128xf32>
    %48 = arith.mulf %47, %46 : vector<32x128xf32>
    %49 = arith.subf %43, %48 : vector<32x128xf32>
    %cst_19 = arith.constant 2.000000e+00 : f32
    %50 = vector.broadcast %cst_19 : f32 to vector<32x128xf32>
    %51 = arith.mulf %50, %49 : vector<32x128xf32>
    %cst_20 = arith.constant 1.000000e+00 : f32
    %52 = vector.broadcast %cst_20 : f32 to vector<32x128xf32>
    %53 = arith.subf %52, %51 : vector<32x128xf32>
    %cst_21 = arith.constant -1.000000e+30 : f32
    %54 = vector.broadcast %cst_21 : f32 to vector<32x128xf32>
    %55 = arith.select %42, %36, %54 : vector<32x128xi1>, vector<32x128xf32>
    %56 = math.exp %55 : vector<32x128xf32>
    %57 = arith.mulf %53, %56 : vector<32x128xf32>
    %cst_22 = arith.constant dense<0.000000e+00> : vector<32x128xf32>
    %58 = tpu.matmul %57, %9, %cst_22 {dimension_numbers = #tpu.dot_dimension_numbers<[1], [0], [0], [1], [0, 0, 1, 1], [], []>} : vector<32x128xf32>, vector<128x128xf32>, vector<32x128xf32> -> vector<32x128xf32>
    %59 = vector.extract_strided_slice %58 {offsets = [0, 32], sizes = [32, 1], strides = [1, 1]} : vector<32x128xf32> to vector<32x1xf32>
    %60 = vector.extract_strided_slice %36 {offsets = [0, 32], sizes = [32, 1], strides = [1, 1]} : vector<32x128xf32> to vector<32x1xf32>
    %61 = arith.negf %59 : vector<32x1xf32>
    %62 = math.exp %61 : vector<32x1xf32>
    %cst_23 = arith.constant 1.000000e+00 : f32
    %63 = vector.broadcast %cst_23 : f32 to vector<32x1xf32>
    %64 = arith.addf %63, %62 : vector<32x1xf32>
    %65 = arith.divf %63, %64 : vector<32x1xf32>
    %66 = arith.negf %60 : vector<32x1xf32>
    %67 = math.exp %66 : vector<32x1xf32>
    %cst_24 = arith.constant 1.000000e+00 : f32
    %68 = vector.broadcast %cst_24 : f32 to vector<32x1xf32>
    %69 = arith.addf %68, %67 : vector<32x1xf32>
    %70 = arith.divf %68, %69 : vector<32x1xf32>
    %71 = vector.broadcast %3 : f32 to vector<32x1xf32>
    %72 = arith.mulf %65, %71 : vector<32x1xf32>
    %73 = vector.broadcast %4 : f32 to vector<32x1xf32>
    %74 = arith.mulf %70, %73 : vector<32x1xf32>
    %75 = arith.addf %72, %74 : vector<32x1xf32>
    %cst_25 = arith.constant 5.000000e-01 : f32
    %76 = vector.broadcast %cst_25 : f32 to vector<32x1xf32>
    %77 = arith.mulf %75, %76 : vector<32x1xf32>
    %78 = vector.broadcast %5 : f32 to vector<32x1xf32>
    %79 = arith.mulf %65, %78 : vector<32x1xf32>
    %80 = vector.broadcast %6 : f32 to vector<32x1xf32>
    %81 = arith.mulf %70, %80 : vector<32x1xf32>
    %82 = arith.addf %79, %81 : vector<32x1xf32>
    %cst_26 = arith.constant 5.000000e-01 : f32
    %83 = vector.broadcast %cst_26 : f32 to vector<32x1xf32>
    %84 = arith.mulf %82, %83 : vector<32x1xf32>
    %85 = arith.maximumf %77, %84 : vector<32x1xf32>
    %86 = arith.subf %77, %85 : vector<32x1xf32>
    %87 = math.exp %86 : vector<32x1xf32>
    %88 = arith.subf %84, %85 : vector<32x1xf32>
    %89 = math.exp %88 : vector<32x1xf32>
    %90 = arith.addf %87, %89 : vector<32x1xf32>
    %91 = tpu.reciprocal %90 {approx = true} : vector<32x1xf32> -> vector<32x1xf32>
    %92 = arith.mulf %87, %91 : vector<32x1xf32>
    %93 = vector.broadcast %92 : vector<32x1xf32> to vector<32x128xf32>
    %94 = arith.mulf %93, %58 : vector<32x128xf32>
    %95 = arith.mulf %89, %91 : vector<32x1xf32>
    %96 = vector.broadcast %95 : vector<32x1xf32> to vector<32x128xf32>
    %97 = arith.mulf %96, %36 : vector<32x128xf32>
    %98 = arith.addf %94, %97 : vector<32x128xf32>
    %cst_27 = arith.constant 0.000000e+00 : f32
    %99 = vector.broadcast %cst_27 : f32 to vector<32x128xf32>
    %100 = arith.maximumf %98, %99 : vector<32x128xf32>
    %c0_28 = arith.constant 0 : index
    %c0_29 = arith.constant 0 : index
    %101 = vector.load %arg5[%c0_28, %c0_29] : memref<16x32xbf16, #tpu.memory_space<vmem>>, vector<16x32xbf16>
    %102 = arith.extf %101 : vector<16x32xbf16> to vector<16x32xf32>
    %c4 = arith.constant 4 : index
    %103 = memref.load %arg13[%c4] : memref<12xf32, #tpu.memory_space<smem>>
    %c5 = arith.constant 5 : index
    %104 = memref.load %arg13[%c5] : memref<12xf32, #tpu.memory_space<smem>>
    %c6 = arith.constant 6 : index
    %105 = memref.load %arg13[%c6] : memref<12xf32, #tpu.memory_space<smem>>
    %c7 = arith.constant 7 : index
    %106 = memref.load %arg13[%c7] : memref<12xf32, #tpu.memory_space<smem>>
    %c0_30 = arith.constant 0 : index
    %c0_31 = arith.constant 0 : index
    %107 = vector.load %arg6[%c0_30, %c0_31] : memref<128x128xf32, #tpu.memory_space<vmem>>, vector<128x128xf32>
    %c0_32 = arith.constant 0 : index
    %c0_33 = arith.constant 0 : index
    %108 = vector.load %arg7[%c0_32, %c0_33] : memref<1x128xf32, #tpu.memory_space<vmem>>, vector<1x128xf32>
    %c0_34 = arith.constant 0 : index
    %c0_35 = arith.constant 0 : index
    %109 = vector.load %arg8[%c0_34, %c0_35] : memref<128x128xf32, #tpu.memory_space<vmem>>, vector<128x128xf32>
    %cst_36 = arith.constant dense<0.000000e+00> : vector<32x128xf32>
    %110 = tpu.matmul %100, %107, %cst_36 {dimension_numbers = #tpu.dot_dimension_numbers<[1], [0], [0], [1], [0, 0, 1, 1], [], []>} : vector<32x128xf32>, vector<128x128xf32>, vector<32x128xf32> -> vector<32x128xf32>
    %111 = vector.broadcast %108 : vector<1x128xf32> to vector<32x128xf32>
    %112 = arith.addf %110, %111 : vector<32x128xf32>
    %113 = math.tanh %112 : vector<32x128xf32>
    %114 = math.absf %113 : vector<32x128xf32>
    %cst_37 = arith.constant 0.000000e+00 : f32
    %115 = vector.broadcast %cst_37 : f32 to vector<32x128xf32>
    %116 = arith.cmpf ogt, %114, %115 : vector<32x128xf32>
    %117 = math.log %114 : vector<32x128xf32>
    %cst_38 = arith.constant -1.000000e+30 : f32
    %118 = vector.broadcast %cst_38 : f32 to vector<32x128xf32>
    %119 = arith.select %116, %117, %118 : vector<32x128xi1>, vector<32x128xf32>
    %cst_39 = arith.constant 0.000000e+00 : f32
    %120 = vector.broadcast %cst_39 : f32 to vector<32x128xf32>
    %121 = arith.cmpf olt, %113, %120 : vector<32x128xf32>
    %122 = arith.extui %121 : vector<32x128xi1> to vector<32x128xi32>
    %123 = arith.sitofp %122 : vector<32x128xi32> to vector<32x128xf32>
    %c8_i32_40 = arith.constant 8 : i32
    %124 = tpu.dynamic_rotate %123 by %c8_i32_40 dim 1 : vector<32x128xf32>, i32 -> vector<32x128xf32>
    %125 = tpu.iota {dimensions = array<i32: 1>} : vector<32x128xi32>
    %c33_i32_41 = arith.constant 33 : i32
    %126 = vector.broadcast %c33_i32_41 : i32 to vector<32x128xi32>
    %127 = arith.cmpi slt, %125, %126 : vector<32x128xi32>
    %c41_i32_42 = arith.constant 41 : i32
    %128 = vector.broadcast %c41_i32_42 : i32 to vector<32x128xi32>
    %129 = arith.cmpi slt, %125, %128 : vector<32x128xi32>
    %c49_i32_43 = arith.constant 49 : i32
    %130 = vector.broadcast %c49_i32_43 : i32 to vector<32x128xi32>
    %131 = arith.cmpi slt, %125, %130 : vector<32x128xi32>
    %cst_44 = arith.constant 0.000000e+00 : f32
    %132 = vector.broadcast %cst_44 : f32 to vector<32x128xf32>
    %133 = arith.select %131, %124, %132 : vector<32x128xi1>, vector<32x128xf32>
    %134 = arith.select %129, %119, %133 : vector<32x128xi1>, vector<32x128xf32>
    %135 = arith.select %127, %110, %134 : vector<32x128xi1>, vector<32x128xf32>
    %cst_45 = arith.constant dense<0.000000e+00> : vector<16x128xf32>
    %136 = tpu.matmul %102, %135, %cst_45 {dimension_numbers = #tpu.dot_dimension_numbers<[1], [0], [0], [1], [0, 0, 1, 1], [], []>} : vector<16x32xf32>, vector<32x128xf32>, vector<16x128xf32> -> vector<16x128xf32>
    %137 = tpu.iota {dimensions = array<i32: 1>} : vector<16x128xi32>
    %c33_i32_46 = arith.constant 33 : i32
    %138 = vector.broadcast %c33_i32_46 : i32 to vector<16x128xi32>
    %139 = arith.cmpi sge, %137, %138 : vector<16x128xi32>
    %c41_i32_47 = arith.constant 41 : i32
    %140 = vector.broadcast %c41_i32_47 : i32 to vector<16x128xi32>
    %141 = arith.cmpi slt, %137, %140 : vector<16x128xi32>
    %142 = arith.andi %139, %141 : vector<16x128xi1>
    %c120_i32_48 = arith.constant 120 : i32
    %143 = tpu.dynamic_rotate %136 by %c120_i32_48 dim 1 : vector<16x128xf32>, i32 -> vector<16x128xf32>
    %cst_49 = arith.constant 5.000000e-01 : f32
    %144 = vector.broadcast %cst_49 : f32 to vector<16x128xf32>
    %145 = arith.mulf %143, %144 : vector<16x128xf32>
    %146 = math.floor %145 : vector<16x128xf32>
    %cst_50 = arith.constant 2.000000e+00 : f32
    %147 = vector.broadcast %cst_50 : f32 to vector<16x128xf32>
    %148 = arith.mulf %147, %146 : vector<16x128xf32>
    %149 = arith.subf %143, %148 : vector<16x128xf32>
    %cst_51 = arith.constant 2.000000e+00 : f32
    %150 = vector.broadcast %cst_51 : f32 to vector<16x128xf32>
    %151 = arith.mulf %150, %149 : vector<16x128xf32>
    %cst_52 = arith.constant 1.000000e+00 : f32
    %152 = vector.broadcast %cst_52 : f32 to vector<16x128xf32>
    %153 = arith.subf %152, %151 : vector<16x128xf32>
    %cst_53 = arith.constant -1.000000e+30 : f32
    %154 = vector.broadcast %cst_53 : f32 to vector<16x128xf32>
    %155 = arith.select %142, %136, %154 : vector<16x128xi1>, vector<16x128xf32>
    %156 = math.exp %155 : vector<16x128xf32>
    %157 = arith.mulf %153, %156 : vector<16x128xf32>
    %cst_54 = arith.constant dense<0.000000e+00> : vector<16x128xf32>
    %158 = tpu.matmul %157, %109, %cst_54 {dimension_numbers = #tpu.dot_dimension_numbers<[1], [0], [0], [1], [0, 0, 1, 1], [], []>} : vector<16x128xf32>, vector<128x128xf32>, vector<16x128xf32> -> vector<16x128xf32>
    %159 = vector.extract_strided_slice %158 {offsets = [0, 32], sizes = [16, 1], strides = [1, 1]} : vector<16x128xf32> to vector<16x1xf32>
    %160 = vector.extract_strided_slice %136 {offsets = [0, 32], sizes = [16, 1], strides = [1, 1]} : vector<16x128xf32> to vector<16x1xf32>
    %161 = arith.negf %159 : vector<16x1xf32>
    %162 = math.exp %161 : vector<16x1xf32>
    %cst_55 = arith.constant 1.000000e+00 : f32
    %163 = vector.broadcast %cst_55 : f32 to vector<16x1xf32>
    %164 = arith.addf %163, %162 : vector<16x1xf32>
    %165 = arith.divf %163, %164 : vector<16x1xf32>
    %166 = arith.negf %160 : vector<16x1xf32>
    %167 = math.exp %166 : vector<16x1xf32>
    %cst_56 = arith.constant 1.000000e+00 : f32
    %168 = vector.broadcast %cst_56 : f32 to vector<16x1xf32>
    %169 = arith.addf %168, %167 : vector<16x1xf32>
    %170 = arith.divf %168, %169 : vector<16x1xf32>
    %171 = vector.broadcast %103 : f32 to vector<16x1xf32>
    %172 = arith.mulf %165, %171 : vector<16x1xf32>
    %173 = vector.broadcast %104 : f32 to vector<16x1xf32>
    %174 = arith.mulf %170, %173 : vector<16x1xf32>
    %175 = arith.addf %172, %174 : vector<16x1xf32>
    %cst_57 = arith.constant 5.000000e-01 : f32
    %176 = vector.broadcast %cst_57 : f32 to vector<16x1xf32>
    %177 = arith.mulf %175, %176 : vector<16x1xf32>
    %178 = vector.broadcast %105 : f32 to vector<16x1xf32>
    %179 = arith.mulf %165, %178 : vector<16x1xf32>
    %180 = vector.broadcast %106 : f32 to vector<16x1xf32>
    %181 = arith.mulf %170, %180 : vector<16x1xf32>
    %182 = arith.addf %179, %181 : vector<16x1xf32>
    %cst_58 = arith.constant 5.000000e-01 : f32
    %183 = vector.broadcast %cst_58 : f32 to vector<16x1xf32>
    %184 = arith.mulf %182, %183 : vector<16x1xf32>
    %185 = arith.maximumf %177, %184 : vector<16x1xf32>
    %186 = arith.subf %177, %185 : vector<16x1xf32>
    %187 = math.exp %186 : vector<16x1xf32>
    %188 = arith.subf %184, %185 : vector<16x1xf32>
    %189 = math.exp %188 : vector<16x1xf32>
    %190 = arith.addf %187, %189 : vector<16x1xf32>
    %191 = tpu.reciprocal %190 {approx = true} : vector<16x1xf32> -> vector<16x1xf32>
    %192 = arith.mulf %187, %191 : vector<16x1xf32>
    %193 = vector.broadcast %192 : vector<16x1xf32> to vector<16x128xf32>
    %194 = arith.mulf %193, %158 : vector<16x128xf32>
    %195 = arith.mulf %189, %191 : vector<16x1xf32>
    %196 = vector.broadcast %195 : vector<16x1xf32> to vector<16x128xf32>
    %197 = arith.mulf %196, %136 : vector<16x128xf32>
    %198 = arith.addf %194, %197 : vector<16x128xf32>
    %cst_59 = arith.constant 0.000000e+00 : f32
    %199 = vector.broadcast %cst_59 : f32 to vector<16x128xf32>
    %200 = arith.maximumf %198, %199 : vector<16x128xf32>
    %c0_60 = arith.constant 0 : index
    %c0_61 = arith.constant 0 : index
    %201 = vector.load %arg9[%c0_60, %c0_61] : memref<8x16xbf16, #tpu.memory_space<vmem>>, vector<8x16xbf16>
    %202 = arith.extf %201 : vector<8x16xbf16> to vector<8x16xf32>
    %c8 = arith.constant 8 : index
    %203 = memref.load %arg13[%c8] : memref<12xf32, #tpu.memory_space<smem>>
    %c9 = arith.constant 9 : index
    %204 = memref.load %arg13[%c9] : memref<12xf32, #tpu.memory_space<smem>>
    %c10 = arith.constant 10 : index
    %205 = memref.load %arg13[%c10] : memref<12xf32, #tpu.memory_space<smem>>
    %c11 = arith.constant 11 : index
    %206 = memref.load %arg13[%c11] : memref<12xf32, #tpu.memory_space<smem>>
    %c0_62 = arith.constant 0 : index
    %c0_63 = arith.constant 0 : index
    %207 = vector.load %arg10[%c0_62, %c0_63] : memref<128x128xf32, #tpu.memory_space<vmem>>, vector<128x128xf32>
    %c0_64 = arith.constant 0 : index
    %c0_65 = arith.constant 0 : index
    %208 = vector.load %arg11[%c0_64, %c0_65] : memref<1x128xf32, #tpu.memory_space<vmem>>, vector<1x128xf32>
    %c0_66 = arith.constant 0 : index
    %c0_67 = arith.constant 0 : index
    %209 = vector.load %arg12[%c0_66, %c0_67] : memref<128x128xf32, #tpu.memory_space<vmem>>, vector<128x128xf32>
    %cst_68 = arith.constant dense<0.000000e+00> : vector<16x128xf32>
    %210 = tpu.matmul %200, %207, %cst_68 {dimension_numbers = #tpu.dot_dimension_numbers<[1], [0], [0], [1], [0, 0, 1, 1], [], []>} : vector<16x128xf32>, vector<128x128xf32>, vector<16x128xf32> -> vector<16x128xf32>
    %211 = vector.broadcast %208 : vector<1x128xf32> to vector<16x128xf32>
    %212 = arith.addf %210, %211 : vector<16x128xf32>
    %213 = math.tanh %212 : vector<16x128xf32>
    %214 = math.absf %213 : vector<16x128xf32>
    %cst_69 = arith.constant 0.000000e+00 : f32
    %215 = vector.broadcast %cst_69 : f32 to vector<16x128xf32>
    %216 = arith.cmpf ogt, %214, %215 : vector<16x128xf32>
    %217 = math.log %214 : vector<16x128xf32>
    %cst_70 = arith.constant -1.000000e+30 : f32
    %218 = vector.broadcast %cst_70 : f32 to vector<16x128xf32>
    %219 = arith.select %216, %217, %218 : vector<16x128xi1>, vector<16x128xf32>
    %cst_71 = arith.constant 0.000000e+00 : f32
    %220 = vector.broadcast %cst_71 : f32 to vector<16x128xf32>
    %221 = arith.cmpf olt, %213, %220 : vector<16x128xf32>
    %222 = arith.extui %221 : vector<16x128xi1> to vector<16x128xi32>
    %223 = arith.sitofp %222 : vector<16x128xi32> to vector<16x128xf32>
    %c8_i32_72 = arith.constant 8 : i32
    %224 = tpu.dynamic_rotate %223 by %c8_i32_72 dim 1 : vector<16x128xf32>, i32 -> vector<16x128xf32>
    %225 = tpu.iota {dimensions = array<i32: 1>} : vector<16x128xi32>
    %c9_i32 = arith.constant 9 : i32
    %226 = vector.broadcast %c9_i32 : i32 to vector<16x128xi32>
    %227 = arith.cmpi slt, %225, %226 : vector<16x128xi32>
    %c17_i32 = arith.constant 17 : i32
    %228 = vector.broadcast %c17_i32 : i32 to vector<16x128xi32>
    %229 = arith.cmpi slt, %225, %228 : vector<16x128xi32>
    %c25_i32 = arith.constant 25 : i32
    %230 = vector.broadcast %c25_i32 : i32 to vector<16x128xi32>
    %231 = arith.cmpi slt, %225, %230 : vector<16x128xi32>
    %cst_73 = arith.constant 0.000000e+00 : f32
    %232 = vector.broadcast %cst_73 : f32 to vector<16x128xf32>
    %233 = arith.select %231, %224, %232 : vector<16x128xi1>, vector<16x128xf32>
    %234 = arith.select %229, %219, %233 : vector<16x128xi1>, vector<16x128xf32>
    %235 = arith.select %227, %210, %234 : vector<16x128xi1>, vector<16x128xf32>
    %cst_74 = arith.constant dense<0.000000e+00> : vector<8x128xf32>
    %236 = tpu.matmul %202, %235, %cst_74 {dimension_numbers = #tpu.dot_dimension_numbers<[1], [0], [0], [1], [0, 0, 1, 1], [], []>} : vector<8x16xf32>, vector<16x128xf32>, vector<8x128xf32> -> vector<8x128xf32>
    %237 = tpu.iota {dimensions = array<i32: 1>} : vector<8x128xi32>
    %c9_i32_75 = arith.constant 9 : i32
    %238 = vector.broadcast %c9_i32_75 : i32 to vector<8x128xi32>
    %239 = arith.cmpi sge, %237, %238 : vector<8x128xi32>
    %c17_i32_76 = arith.constant 17 : i32
    %240 = vector.broadcast %c17_i32_76 : i32 to vector<8x128xi32>
    %241 = arith.cmpi slt, %237, %240 : vector<8x128xi32>
    %242 = arith.andi %239, %241 : vector<8x128xi1>
    %c120_i32_77 = arith.constant 120 : i32
    %243 = tpu.dynamic_rotate %236 by %c120_i32_77 dim 1 : vector<8x128xf32>, i32 -> vector<8x128xf32>
    %cst_78 = arith.constant 5.000000e-01 : f32
    %244 = vector.broadcast %cst_78 : f32 to vector<8x128xf32>
    %245 = arith.mulf %243, %244 : vector<8x128xf32>
    %246 = math.floor %245 : vector<8x128xf32>
    %cst_79 = arith.constant 2.000000e+00 : f32
    %247 = vector.broadcast %cst_79 : f32 to vector<8x128xf32>
    %248 = arith.mulf %247, %246 : vector<8x128xf32>
    %249 = arith.subf %243, %248 : vector<8x128xf32>
    %cst_80 = arith.constant 2.000000e+00 : f32
    %250 = vector.broadcast %cst_80 : f32 to vector<8x128xf32>
    %251 = arith.mulf %250, %249 : vector<8x128xf32>
    %cst_81 = arith.constant 1.000000e+00 : f32
    %252 = vector.broadcast %cst_81 : f32 to vector<8x128xf32>
    %253 = arith.subf %252, %251 : vector<8x128xf32>
    %cst_82 = arith.constant -1.000000e+30 : f32
    %254 = vector.broadcast %cst_82 : f32 to vector<8x128xf32>
    %255 = arith.select %242, %236, %254 : vector<8x128xi1>, vector<8x128xf32>
    %256 = math.exp %255 : vector<8x128xf32>
    %257 = arith.mulf %253, %256 : vector<8x128xf32>
    %cst_83 = arith.constant dense<0.000000e+00> : vector<8x128xf32>
    %258 = tpu.matmul %257, %209, %cst_83 {dimension_numbers = #tpu.dot_dimension_numbers<[1], [0], [0], [1], [0, 0, 1, 1], [], []>} : vector<8x128xf32>, vector<128x128xf32>, vector<8x128xf32> -> vector<8x128xf32>
    %259 = vector.extract_strided_slice %258 {offsets = [0, 8], sizes = [8, 1], strides = [1, 1]} : vector<8x128xf32> to vector<8x1xf32>
    %260 = vector.extract_strided_slice %236 {offsets = [0, 8], sizes = [8, 1], strides = [1, 1]} : vector<8x128xf32> to vector<8x1xf32>
    %261 = arith.negf %259 : vector<8x1xf32>
    %262 = math.exp %261 : vector<8x1xf32>
    %cst_84 = arith.constant 1.000000e+00 : f32
    %263 = vector.broadcast %cst_84 : f32 to vector<8x1xf32>
    %264 = arith.addf %263, %262 : vector<8x1xf32>
    %265 = arith.divf %263, %264 : vector<8x1xf32>
    %266 = arith.negf %260 : vector<8x1xf32>
    %267 = math.exp %266 : vector<8x1xf32>
    %cst_85 = arith.constant 1.000000e+00 : f32
    %268 = vector.broadcast %cst_85 : f32 to vector<8x1xf32>
    %269 = arith.addf %268, %267 : vector<8x1xf32>
    %270 = arith.divf %268, %269 : vector<8x1xf32>
    %271 = vector.broadcast %203 : f32 to vector<8x1xf32>
    %272 = arith.mulf %265, %271 : vector<8x1xf32>
    %273 = vector.broadcast %204 : f32 to vector<8x1xf32>
    %274 = arith.mulf %270, %273 : vector<8x1xf32>
    %275 = arith.addf %272, %274 : vector<8x1xf32>
    %cst_86 = arith.constant 5.000000e-01 : f32
    %276 = vector.broadcast %cst_86 : f32 to vector<8x1xf32>
    %277 = arith.mulf %275, %276 : vector<8x1xf32>
    %278 = vector.broadcast %205 : f32 to vector<8x1xf32>
    %279 = arith.mulf %265, %278 : vector<8x1xf32>
    %280 = vector.broadcast %206 : f32 to vector<8x1xf32>
    %281 = arith.mulf %270, %280 : vector<8x1xf32>
    %282 = arith.addf %279, %281 : vector<8x1xf32>
    %cst_87 = arith.constant 5.000000e-01 : f32
    %283 = vector.broadcast %cst_87 : f32 to vector<8x1xf32>
    %284 = arith.mulf %282, %283 : vector<8x1xf32>
    %285 = arith.maximumf %277, %284 : vector<8x1xf32>
    %286 = arith.subf %277, %285 : vector<8x1xf32>
    %287 = math.exp %286 : vector<8x1xf32>
    %288 = arith.subf %284, %285 : vector<8x1xf32>
    %289 = math.exp %288 : vector<8x1xf32>
    %290 = arith.addf %287, %289 : vector<8x1xf32>
    %291 = tpu.reciprocal %290 {approx = true} : vector<8x1xf32> -> vector<8x1xf32>
    %292 = arith.mulf %287, %291 : vector<8x1xf32>
    %293 = vector.broadcast %292 : vector<8x1xf32> to vector<8x128xf32>
    %294 = arith.mulf %293, %258 : vector<8x128xf32>
    %295 = arith.mulf %289, %291 : vector<8x1xf32>
    %296 = vector.broadcast %295 : vector<8x1xf32> to vector<8x128xf32>
    %297 = arith.mulf %296, %236 : vector<8x128xf32>
    %298 = arith.addf %294, %297 : vector<8x128xf32>
    %c0_88 = arith.constant 0 : index
    %c0_89 = arith.constant 0 : index
    %299 = vector.load %arg14[%c0_88, %c0_89] : memref<8x128xf32, #tpu.memory_space<vmem>>, vector<8x128xf32>
    tpu.vector_store %arg14[%c0_88, %c0_89], %298 {strides = array<i32>} : memref<8x128xf32, #tpu.memory_space<vmem>>, vector<8x128xf32>,
    return
  }
}

</mosaic_0001>

<llo_original>
// kernel: tpu_custom_call.1
$region0: #{tpu_custom_call.1}
  #allocation0 [shape = 'u32[]', space=smem, size = 0x4, offset = 0x4, fixed_abs, tag = 'smem constant byte address 0x4 - core index']
  #allocation1 [shape = 'u32[144,128]{1,0:T(1,128)}', space=vmem, size = 0x12000, scoped, tag = 'internal scratch']
  %s0 = inlined_call_operand.hbm [shape: f32[64,128], index: 0, kind: input, shape index: {}]
  %s1 = inlined_call_operand.hbm [shape: bf16[32,64], index: 1, kind: input, shape index: {}]
  %s2 = inlined_call_operand.hbm [shape: f32[128,128], index: 2, kind: input, shape index: {}]
  %s3 = inlined_call_operand.vmem [shape: f32[1,128], index: 3, kind: input, shape index: {}]
  %s4 = inlined_call_operand.hbm [shape: f32[128,128], index: 4, kind: input, shape index: {}]
  %s5 = inlined_call_operand.vmem [shape: bf16[16,32], index: 5, kind: input, shape index: {}]
  %s6 = inlined_call_operand.hbm [shape: f32[128,128], index: 6, kind: input, shape index: {}]
  %s7 = inlined_call_operand.vmem [shape: f32[1,128], index: 7, kind: input, shape index: {}]
  %s8 = inlined_call_operand.hbm [shape: f32[128,128], index: 8, kind: input, shape index: {}]
  %s9 = inlined_call_operand.vmem [shape: bf16[8,16], index: 9, kind: input, shape index: {}]
  %s10 = inlined_call_operand.hbm [shape: f32[128,128], index: 10, kind: input, shape index: {}]
  %s11 = inlined_call_operand.vmem [shape: f32[1,128], index: 11, kind: input, shape index: {}]
  %s12 = inlined_call_operand.hbm [shape: f32[128,128], index: 12, kind: input, shape index: {}]
  %s13 = inlined_call_operand.vmem [shape: f32[12], index: 13, kind: input, shape index: {}]
  %s14 = inlined_call_operand.hbm [shape: f32[8,128], index: 14, kind: output, shape index: {}]
  %s15 = sld [smem:[#allocation0]]
  $region102: #{tpu_custom_call.1} parent=0
    _
  %s17 = ssub.s32 1, %s15
  %s18 = scalar_select 0, %s17, %s15
  $region1: #{tpu_custom_call.1} parent=0
    #allocation2 [shape = 'u8[32768]{0}', space=vmem, size = 0x8000, scoped, tag = 'input window, operand 0, single buffered']
    #allocation3 [shape = 's32[1]{0}', space=sflag, size = 0x4, scoped, tag = 'scoped memory for tpu_custom_call.1']
    #allocation4 [shape = 's32[1]{0}', space=sflag, size = 0x4, scoped, tag = 'scoped memory for tpu_custom_call.1']
    #allocation5 [shape = 's32[1]{0}', space=sflag, size = 0x4, scoped, tag = 'scoped memory for tpu_custom_call.1']
    #allocation6 [shape = 'u8[8192]{0}', space=vmem, size = 0x2000, scoped, tag = 'input window, operand 1, single buffered']
    #allocation7 [shape = 's32[1]{0}', space=sflag, size = 0x4, scoped, tag = 'scoped memory for tpu_custom_call.1']
    #allocation8 [shape = 'u8[65536]{0}', space=vmem, size = 0x10000, scoped, tag = 'input window, operand 2, single buffered']
    #allocation9 [shape = 'u8[65536]{0}', space=vmem, size = 0x10000, scoped, tag = 'input window, operand 4, single buffered']
    #allocation10 [shape = 's32[1]{0}', space=sflag, size = 0x4, scoped, tag = 'scoped memory for tpu_custom_call.1']
    #allocation11 [shape = 'u8[65536]{0}', space=vmem, size = 0x10000, scoped, tag = 'input window, operand 6, single buffered']
    #allocation12 [shape = 'u8[65536]{0}', space=vmem, size = 0x10000, scoped, tag = 'input window, operand 8, single buffered']
    #allocation13 [shape = 's32[1]{0}', space=sflag, size = 0x4, scoped, tag = 'scoped memory for tpu_custom_call.1']
    #allocation14 [shape = 'u8[65536]{0}', space=vmem, size = 0x10000, scoped, tag = 'input window, operand 10, single buffered']
    #allocation15 [shape = 'u8[65536]{0}', space=vmem, size = 0x10000, scoped, tag = 'input window, operand 12, single buffered']
    #allocation16 [shape = 's32[1]{0}', space=sflag, size = 0x4, scoped, tag = 'scoped memory for tpu_custom_call.1']
    #allocation17 [shape = 'u8[512]{0}', space=smem, size = 0x200, scoped, tag = 'input window, operand 13, single buffered']
    #allocation18 [shape = 'u8[4096]{0}', space=vmem, size = 0x1000, scoped, tag = 'output window, operand 0, single buffered']
    %19 = vsyncpa [#allocation3], 0
    %20 = vsyncpa [#allocation7], 0
    %21 = vsyncpa [#allocation10], 0
    %22 = vsyncpa [#allocation13], 0
    %23 = vsyncpa [#allocation16], 0
    %24 = vsyncpa [#allocation5], 0
    %25 = vsyncpa [#allocation4], 0
    // Predicated region
    $region2: #{tpu_custom_call.1} parent=1 // pred_check
      _
    $region3: #{tpu_custom_call.1} parent=1 // pred_check_branch
      %27 = sbr.rel (0) target = $region5
    $region4: #{tpu_custom_call.1} parent=1 // pred_region
      %s29 = ssub.s32 1024, 1024
      %30 = vsyncadd [#allocation3], %s29
      %s31 = sshll.u32 [#allocation2], 4
      %s32 = int_to_ptr.vmem [resolvable:$true] %s31
      %37 = dma.hbm_to_vmem [thread:$0]  %s0, 1024, %s32, [#allocation3], 128, 128, 8
    $region5: #{tpu_custom_call.1} parent=1 // pred_fallthru
      _
    // Predicated region
    $region6: #{tpu_custom_call.1} parent=1 // pred_check
      _
    $region7: #{tpu_custom_call.1} parent=1 // pred_check_branch
      %39 = sbr.rel (0) target = $region9
    $region8: #{tpu_custom_call.1} parent=1 // pred_region
      %s41 = ssub.s32 256, 256
      %42 = vsyncadd [#allocation7], %s41
      %s43 = sshll.u32 [#allocation6], 4
      %s44 = int_to_ptr.vmem [resolvable:$true] %s43
      %49 = dma.hbm_to_vmem [thread:$0]  %s1, 256, %s44, [#allocation7], 64, 64, 4
    $region9: #{tpu_custom_call.1} parent=1 // pred_fallthru
      _
    // Predicated region
    $region10: #{tpu_custom_call.1} parent=1 // pred_check
      _
    $region11: #{tpu_custom_call.1} parent=1 // pred_check_branch
      %51 = sbr.rel (0) target = $region13
    $region12: #{tpu_custom_call.1} parent=1 // pred_region
      %s53 = ssub.s32 2048, 2048
      %54 = vsyncadd [#allocation7], %s53
      %s55 = sshll.u32 [#allocation8], 4
      %s56 = int_to_ptr.vmem [resolvable:$true] %s55
      %61 = dma.hbm_to_vmem [thread:$0]  %s2, 2048, %s56, [#allocation7], 128, 128, 8
    $region13: #{tpu_custom_call.1} parent=1 // pred_fallthru
      _
    // Predicated region
    $region14: #{tpu_custom_call.1} parent=1 // pred_check
      _
    $region15: #{tpu_custom_call.1} parent=1 // pred_check_branch
      %63 = sbr.rel (0) target = $region17
    $region16: #{tpu_custom_call.1} parent=1 // pred_region
      _
    $region17: #{tpu_custom_call.1} parent=1 // pred_fallthru
      _
    // Predicated region
    $region18: #{tpu_custom_call.1} parent=1 // pred_check
      _
    $region19: #{tpu_custom_call.1} parent=1 // pred_check_branch
      %65 = sbr.rel (0) target = $region21
    $region20: #{tpu_custom_call.1} parent=1 // pred_region
      %s67 = ssub.s32 2048, 2048
      %68 = vsyncadd [#allocation10], %s67
      %s69 = sshll.u32 [#allocation9], 4
      %s70 = int_to_ptr.vmem [resolvable:$true] %s69
      %75 = dma.hbm_to_vmem [thread:$0]  %s4, 2048, %s70, [#allocation10], 128, 128, 8
    $region21: #{tpu_custom_call.1} parent=1 // pred_fallthru
      _
    // Predicated region
    $region22: #{tpu_custom_call.1} parent=1 // pred_check
      _
    $region23: #{tpu_custom_call.1} parent=1 // pred_check_branch
      %77 = sbr.rel (0) target = $region25
    $region24: #{tpu_custom_call.1} parent=1 // pred_region
      _
    $region25: #{tpu_custom_call.1} parent=1 // pred_fallthru
      _
    // Predicated region
    $region26: #{tpu_custom_call.1} parent=1 // pred_check
      _
    $region27: #{tpu_custom_call.1} parent=1 // pred_check_branch
      %79 = sbr.rel (0) target = $region29
    $region28: #{tpu_custom_call.1} parent=1 // pred_region
      %s81 = ssub.s32 2048, 2048
      %82 = vsyncadd [#allocation10], %s81
      %s83 = sshll.u32 [#allocation11], 4
      %s84 = int_to_ptr.vmem [resolvable:$true] %s83
      %89 = dma.hbm_to_vmem [thread:$0]  %s6, 2048, %s84, [#allocation10], 128, 128, 8
    $region29: #{tpu_custom_call.1} parent=1 // pred_fallthru
      _
    // Predicated region
    $region30: #{tpu_custom_call.1} parent=1 // pred_check
      _
    $region31: #{tpu_custom_call.1} parent=1 // pred_check_branch
      %91 = sbr.rel (0) target = $region33
    $region32: #{tpu_custom_call.1} parent=1 // pred_region
      _
    $region33: #{tpu_custom_call.1} parent=1 // pred_fallthru
      _
    // Predicated region
    $region34: #{tpu_custom_call.1} parent=1 // pred_check
      _
    $region35: #{tpu_custom_call.1} parent=1 // pred_check_branch
      %93 = sbr.rel (0) target = $region37
    $region36: #{tpu_custom_call.1} parent=1 // pred_region
      %s95 = ssub.s32 2048, 2048
      %96 = vsyncadd [#allocation13], %s95
      %s97 = sshll.u32 [#allocation12], 4
      %s98 = int_to_ptr.vmem [resolvable:$true] %s97
      %103 = dma.hbm_to_vmem [thread:$0]  %s8, 2048, %s98, [#allocation13], 128, 128, 8
    $region37: #{tpu_custom_call.1} parent=1 // pred_fallthru
      _
    // Predicated region
    $region38: #{tpu_custom_call.1} parent=1 // pred_check
      _
    $region39: #{tpu_custom_call.1} parent=1 // pred_check_branch
      %105 = sbr.rel (0) target = $region41
    $region40: #{tpu_custom_call.1} parent=1 // pred_region
      _
    $region41: #{tpu_custom_call.1} parent=1 // pred_fallthru
      _
    // Predicated region
    $region42: #{tpu_custom_call.1} parent=1 // pred_check
      _
    $region43: #{tpu_custom_call.1} parent=1 // pred_check_branch
      %107 = sbr.rel (0) target = $region45
    $region44: #{tpu_custom_call.1} parent=1 // pred_region
      %s109 = ssub.s32 2048, 2048
      %110 = vsyncadd [#allocation13], %s109
      %s111 = sshll.u32 [#allocation14], 4
      %s112 = int_to_ptr.vmem [resolvable:$true] %s111
      %117 = dma.hbm_to_vmem [thread:$0]  %s10, 2048, %s112, [#allocation13], 128, 128, 8
    $region45: #{tpu_custom_call.1} parent=1 // pred_fallthru
      _
    // Predicated region
    $region46: #{tpu_custom_call.1} parent=1 // pred_check
      _
    $region47: #{tpu_custom_call.1} parent=1 // pred_check_branch
      %119 = sbr.rel (0) target = $region49
    $region48: #{tpu_custom_call.1} parent=1 // pred_region
      _
    $region49: #{tpu_custom_call.1} parent=1 // pred_fallthru
      _
    // Predicated region
    $region50: #{tpu_custom_call.1} parent=1 // pred_check
      _
    $region51: #{tpu_custom_call.1} parent=1 // pred_check_branch
      %121 = sbr.rel (0) target = $region53
    $region52: #{tpu_custom_call.1} parent=1 // pred_region
      %s123 = ssub.s32 2048, 2048
      %124 = vsyncadd [#allocation16], %s123
      %s125 = sshll.u32 [#allocation15], 4
      %s126 = int_to_ptr.vmem [resolvable:$true] %s125
      %131 = dma.hbm_to_vmem [thread:$0]  %s12, 2048, %s126, [#allocation16], 128, 128, 8
    $region53: #{tpu_custom_call.1} parent=1 // pred_fallthru
      _
    // Predicated region
    $region54: #{tpu_custom_call.1} parent=1 // pred_check
      _
    $region55: #{tpu_custom_call.1} parent=1 // pred_check_branch
      %133 = sbr.rel (0) target = $region57
    $region56: #{tpu_custom_call.1} parent=1 // pred_region
      %s135 = ssub.s32 16, 16
      %136 = vsyncadd [#allocation5], %s135
      %s138 = sshll.u32 %s13, 4
      %s139 = int_to_ptr.vmem [resolvable:$true] %s138
      %141 = dma.vmem_to_smem %s139, 16, [#allocation17], [#allocation5]
    $region57: #{tpu_custom_call.1} parent=1 // pred_fallthru
      _
    // Predicated region
    $region58: #{tpu_custom_call.1} parent=1 // pred_check
      _
    $region59: #{tpu_custom_call.1} parent=1 // pred_check_branch
      %143 = sbr.rel (0) target = $region61
    $region60: #{tpu_custom_call.1} parent=1 // pred_region
      %144 = dma.done [#allocation3], 1024
    $region61: #{tpu_custom_call.1} parent=1 // pred_fallthru
      _
    // Predicated region
    $region62: #{tpu_custom_call.1} parent=1 // pred_check
      _
    $region63: #{tpu_custom_call.1} parent=1 // pred_check_branch
      %146 = sbr.rel (0) target = $region65
    $region64: #{tpu_custom_call.1} parent=1 // pred_region
      %147 = dma.done [#allocation7], 256
    $region65: #{tpu_custom_call.1} parent=1 // pred_fallthru
      _
    // Predicated region
    $region66: #{tpu_custom_call.1} parent=1 // pred_check
      _
    $region67: #{tpu_custom_call.1} parent=1 // pred_check_branch
      %149 = sbr.rel (0) target = $region69
    $region68: #{tpu_custom_call.1} parent=1 // pred_region
      %150 = dma.done [#allocation7], 2048
    $region69: #{tpu_custom_call.1} parent=1 // pred_fallthru
      _
    // Predicated region
    $region70: #{tpu_custom_call.1} parent=1 // pred_check
      _
    $region71: #{tpu_custom_call.1} parent=1 // pred_check_branch
      %152 = sbr.rel (0) target = $region73
    $region72: #{tpu_custom_call.1} parent=1 // pred_region
      %153 = dma.done [#allocation10], 2048
    $region73: #{tpu_custom_call.1} parent=1 // pred_fallthru
      _
    // Predicated region
    $region74: #{tpu_custom_call.1} parent=1 // pred_check
      _
    $region75: #{tpu_custom_call.1} parent=1 // pred_check_branch
      %155 = sbr.rel (0) target = $region77
    $region76: #{tpu_custom_call.1} parent=1 // pred_region
      %156 = dma.done [#allocation10], 2048
    $region77: #{tpu_custom_call.1} parent=1 // pred_fallthru
      _
    // Predicated region
    $region78: #{tpu_custom_call.1} parent=1 // pred_check
      _
    $region79: #{tpu_custom_call.1} parent=1 // pred_check_branch
      %158 = sbr.rel (0) target = $region81
    $region80: #{tpu_custom_call.1} parent=1 // pred_region
      %159 = dma.done [#allocation13], 2048
    $region81: #{tpu_custom_call.1} parent=1 // pred_fallthru
      _
    // Predicated region
    $region82: #{tpu_custom_call.1} parent=1 // pred_check
      _
    $region83: #{tpu_custom_call.1} parent=1 // pred_check_branch
      %161 = sbr.rel (0) target = $region85
    $region84: #{tpu_custom_call.1} parent=1 // pred_region
      %162 = dma.done [#allocation13], 2048
    $region85: #{tpu_custom_call.1} parent=1 // pred_fallthru
      _
    // Predicated region
    $region86: #{tpu_custom_call.1} parent=1 // pred_check
      _
    $region87: #{tpu_custom_call.1} parent=1 // pred_check_branch
      %164 = sbr.rel (0) target = $region89
    $region88: #{tpu_custom_call.1} parent=1 // pred_region
      %165 = dma.done [#allocation16], 2048
    $region89: #{tpu_custom_call.1} parent=1 // pred_fallthru
      _
    // Predicated region
    $region90: #{tpu_custom_call.1} parent=1 // pred_check
      _
    $region91: #{tpu_custom_call.1} parent=1 // pred_check_branch
      %167 = sbr.rel (0) target = $region93
    $region92: #{tpu_custom_call.1} parent=1 // pred_region
      %168 = dma.done [#allocation5], 16
    $region93: #{tpu_custom_call.1} parent=1 // pred_fallthru
      _
    %169 = sfence
    %v170 = vld [vmem:[#allocation2] sm:$0xff]
    %v171 = vld [vmem:[#allocation2 + $0x8] sm:$0xff]
    %v172 = vld [vmem:[#allocation2 + $0x10] sm:$0xff]
    %v173 = vld [vmem:[#allocation2 + $0x18] sm:$0xff]
    %v174 = vld [vmem:[#allocation2 + $0x20] sm:$0xff]
    %v175 = vld [vmem:[#allocation2 + $0x28] sm:$0xff]
    %v176 = vld [vmem:[#allocation2 + $0x30] sm:$0xff]
    %v177 = vld [vmem:[#allocation2 + $0x38] sm:$0xff]
    %v178 = vld [vmem:[#allocation6] sm:$0xf]
    %v179 = vld [vmem:[#allocation6 + $0x4] sm:$0xf]
    %v180 = vld [vmem:[#allocation6 + $0x8] sm:$0xf]
    %v181 = vld [vmem:[#allocation6 + $0xc] sm:$0xf]
    %v182 = vunpack.c.l.bf16 %v178
    %v183 = vunpack.c.l.bf16 %v179
    %v184 = vunpack.c.l.bf16 %v180
    %v185 = vunpack.c.l.bf16 %v181
    %s186 = sld [smem:[#allocation17]]
    %s187 = sld [smem:[#allocation17 + $0x1]]
    %s188 = sld [smem:[#allocation17 + $0x2]]
    %s189 = sld [smem:[#allocation17 + $0x3]]
    %v190 = vld [vmem:[#allocation8] sm:$0xff]
    %v191 = vld [vmem:[#allocation8 + $0x8] sm:$0xff]
    %v192 = vld [vmem:[#allocation8 + $0x10] sm:$0xff]
    %v193 = vld [vmem:[#allocation8 + $0x18] sm:$0xff]
    %v194 = vld [vmem:[#allocation8 + $0x20] sm:$0xff]
    %v195 = vld [vmem:[#allocation8 + $0x28] sm:$0xff]
    %v196 = vld [vmem:[#allocation8 + $0x30] sm:$0xff]
    %v197 = vld [vmem:[#allocation8 + $0x38] sm:$0xff]
    %v198 = vld [vmem:[#allocation8 + $0x40] sm:$0xff]
    %v199 = vld [vmem:[#allocation8 + $0x48] sm:$0xff]
    %v200 = vld [vmem:[#allocation8 + $0x50] sm:$0xff]
    %v201 = vld [vmem:[#allocation8 + $0x58] sm:$0xff]
    %v202 = vld [vmem:[#allocation8 + $0x60] sm:$0xff]
    %v203 = vld [vmem:[#allocation8 + $0x68] sm:$0xff]
    %v204 = vld [vmem:[#allocation8 + $0x70] sm:$0xff]
    %v205 = vld [vmem:[#allocation8 + $0x78] sm:$0xff]
    %v206 = vld [vmem:[%s3] sm:$0x1]
    %v207 = vld [vmem:[#allocation9] sm:$0xff]
    %v208 = vld [vmem:[#allocation9 + $0x8] sm:$0xff]
    %v209 = vld [vmem:[#allocation9 + $0x10] sm:$0xff]
    %v210 = vld [vmem:[#allocation9 + $0x18] sm:$0xff]
    %v211 = vld [vmem:[#allocation9 + $0x20] sm:$0xff]
    %v212 = vld [vmem:[#allocation9 + $0x28] sm:$0xff]
    %v213 = vld [vmem:[#allocation9 + $0x30] sm:$0xff]
    %v214 = vld [vmem:[#allocation9 + $0x38] sm:$0xff]
    %v215 = vld [vmem:[#allocation9 + $0x40] sm:$0xff]
    %v216 = vld [vmem:[#allocation9 + $0x48] sm:$0xff]
    %v217 = vld [vmem:[#allocation9 + $0x50] sm:$0xff]
    %v218 = vld [vmem:[#allocation9 + $0x58] sm:$0xff]
    %v219 = vld [vmem:[#allocation9 + $0x60] sm:$0xff]
    %v220 = vld [vmem:[#allocation9 + $0x68] sm:$0xff]
    %v221 = vld [vmem:[#allocation9 + $0x70] sm:$0xff]
    %v222 = vld [vmem:[#allocation9 + $0x78] sm:$0xff]
    %223 = vmatprep.subr.mxu0 0.0
    %224 = vmatpush1.msra.mxu0 %v190
    %225 = vmatprep.subr.mxu0 0.0
    %226 = vmatpush1.msra.mxu0 %v191
    %227 = vmatprep.subr.mxu0 0.0
    %228 = vmatpush1.msra.mxu0 %v192
    %229 = vmatprep.subr.mxu0 0.0
    %230 = vmatpush1.msra.mxu0 %v193
    %231 = vmatprep.subr.mxu0 0.0
    %232 = vmatpush1.msra.mxu0 %v194
    %233 = vmatprep.subr.mxu0 0.0
    %234 = vmatpush1.msra.mxu0 %v195
    %235 = vmatprep.subr.mxu0 0.0
    %236 = vmatpush1.msra.mxu0 %v196
    %237 = vmatprep.subr.mxu0 0.0
    %238 = vmatpush1.msra.mxu0 %v197
    %239 = vmatprep.subr.mxu0 0.0
    %240 = vmatpush1.msra.mxu0 %v198
    %241 = vmatprep.subr.mxu0 0.0
    %242 = vmatpush1.msra.mxu0 %v199
    %243 = vmatprep.subr.mxu0 0.0
    %244 = vmatpush1.msra.mxu0 %v200
    %245 = vmatprep.subr.mxu0 0.0
    %246 = vmatpush1.msra.mxu0 %v201
    %247 = vmatprep.subr.mxu0 0.0
    %248 = vmatpush1.msra.mxu0 %v202
    %249 = vmatprep.subr.mxu0 0.0
    %250 = vmatpush1.msra.mxu0 %v203
    %251 = vmatprep.subr.mxu0 0.0
    %252 = vmatpush1.msra.mxu0 %v204
    %253 = vmatprep.subr.mxu0 0.0
    %254 = vmatpush1.msra.mxu0 %v205
    %255 = vmatprep.subr.mxu0 0.0
    %256 = vmatpush1.msra.mxu0 0.0
    %257 = vmatprep.subr.mxu0 0.0
    %258 = vmatpush1.msra.mxu0 0.0
    %259 = vmatprep.subr.mxu0 0.0
    %260 = vmatpush1.msra.mxu0 0.0
    %261 = vmatprep.subr.mxu0 0.0
    %262 = vmatpush1.msra.mxu0 0.0
    %263 = vmatprep.subr.mxu0 0.0
    %264 = vmatpush1.msra.mxu0 0.0
    %265 = vmatprep.subr.mxu0 0.0
    %266 = vmatpush1.msra.mxu0 0.0
    %267 = vmatprep.subr.mxu0 0.0
    %268 = vmatpush1.msra.mxu0 0.0
    %269 = vmatprep.subr.mxu0 0.0
    %270 = vmatpush1.msra.mxu0 0.0
    %271 = vmatprep.subr.mxu0 0.0
    %272 = vmatpush1.msra.mxu0 0.0
    %273 = vmatprep.subr.mxu0 0.0
    %274 = vmatpush1.msra.mxu0 0.0
    %275 = vmatprep.subr.mxu0 0.0
    %276 = vmatpush1.msra.mxu0 0.0
    %277 = vmatprep.subr.mxu0 0.0
    %278 = vmatpush1.msra.mxu0 0.0
    %279 = vmatprep.subr.mxu0 0.0
    %280 = vmatpush1.msra.mxu0 0.0
    %281 = vmatprep.subr.mxu0 0.0
    %282 = vmatpush1.msra.mxu0 0.0
    %283 = vmatprep.subr.mxu0 0.0
    %284 = vmatpush1.msra.mxu0 0.0
    %285 = vmatprep.subr.mxu0 0.0
    %286 = vmatpush1.msra.mxu0 0.0
    %287 = vmatprep.mubr.f32.mxu0 0.0
    %288 = vmatmul.mubr.f32.gmra.mrb[0].mxu0 %v170
    %v289 = vpop.f32.mrb[0].mxu0
    %v290 = vadd.f32 0.0, %v289
    %v291 = vpop.f32.mrb[0].mxu0
    %292 = vmatprep.mubr.f32.mxu0 0.0
    %293 = vmatmul.mubr.f32.gmra.mrb[0].mxu0 %v171
    %v294 = vpop.f32.mrb[0].mxu0
    %v295 = vadd.f32 0.0, %v294
    %v296 = vpop.f32.mrb[0].mxu0
    %297 = vmatprep.mubr.f32.mxu0 0.0
    %298 = vmatmul.mubr.f32.gmra.mrb[0].mxu0 %v172
    %v299 = vpop.f32.mrb[0].mxu0
    %v300 = vadd.f32 0.0, %v299
    %v301 = vpop.f32.mrb[0].mxu0
    %302 = vmatprep.mubr.f32.mxu0 0.0
    %303 = vmatmul.mubr.f32.gmra.mrb[0].mxu0 %v173
    %v304 = vpop.f32.mrb[0].mxu0
    %v305 = vadd.f32 0.0, %v304
    %v306 = vpop.f32.mrb[0].mxu0
    %307 = vmatprep.mubr.f32.mxu0 0.0
    %308 = vmatmul.mubr.f32.gmra.mrb[0].mxu0 %v174
    %v309 = vpop.f32.mrb[0].mxu0
    %v310 = vadd.f32 0.0, %v309
    %v311 = vpop.f32.mrb[0].mxu0
    %312 = vmatprep.mubr.f32.mxu0 0.0
    %313 = vmatmul.mubr.f32.gmra.mrb[0].mxu0 %v175
    %v314 = vpop.f32.mrb[0].mxu0
    %v315 = vadd.f32 0.0, %v314
    %v316 = vpop.f32.mrb[0].mxu0
    %317 = vmatprep.mubr.f32.mxu0 0.0
    %318 = vmatmul.mubr.f32.gmra.mrb[0].mxu0 %v176
    %v319 = vpop.f32.mrb[0].mxu0
    %v320 = vadd.f32 0.0, %v319
    %v321 = vpop.f32.mrb[0].mxu0
    %322 = vmatprep.mubr.f32.mxu0 0.0
    %323 = vmatmul.mubr.f32.gmra.mrb[0].mxu0 %v177
    %v324 = vpop.f32.mrb[0].mxu0
    %v325 = vadd.f32 0.0, %v324
    %v326 = vpop.f32.mrb[0].mxu0
    %327 = vdwg.mxu0
    %v329 = vlaneseq
    %v330 = vshrl.u32 %v329, 7
    %v331 = vsub.s32 0, %v330
    %v332 = vrot.slane %v206, %v331
    %v334 = vadd.f32 %v290, %v332
    %v335 = vadd.f32 %v295, %v332
    %v336 = vadd.f32 %v300, %v332
    %v337 = vadd.f32 %v305, %v332
    %v338 = vadd.f32 %v310, %v332
    %v339 = vadd.f32 %v315, %v332
    %v340 = vadd.f32 %v320, %v332
    %v341 = vadd.f32 %v325, %v332
    %v342 = vtanh.pop %v334
    %v343 = vtanh.pop %v335
    %v344 = vtanh.pop %v336
    %v345 = vtanh.pop %v337
    %v346 = vtanh.pop %v338
    %v347 = vtanh.pop %v339
    %v348 = vtanh.pop %v340
    %v349 = vtanh.pop %v341
    %v350 = vand.u32 2147483647, %v342
    %v351 = vand.u32 2147483647, %v343
    %v352 = vand.u32 2147483647, %v344
    %v353 = vand.u32 2147483647, %v345
    %v354 = vand.u32 2147483647, %v346
    %v355 = vand.u32 2147483647, %v347
    %v356 = vand.u32 2147483647, %v348
    %v357 = vand.u32 2147483647, %v349
    %vm358 = vcmp.gt.f32.partialorder %v350, 0.0
    %vm359 = vcmp.gt.f32.partialorder %v351, 0.0
    %vm360 = vcmp.gt.f32.partialorder %v352, 0.0
    %vm361 = vcmp.gt.f32.partialorder %v353, 0.0
    %vm362 = vcmp.gt.f32.partialorder %v354, 0.0
    %vm363 = vcmp.gt.f32.partialorder %v355, 0.0
    %vm364 = vcmp.gt.f32.partialorder %v356, 0.0
    %vm365 = vcmp.gt.f32.partialorder %v357, 0.0
    %v366 = vlog2.pop %v350
    %v367 = vmul.f32 %v366, 0.6931472
    %v368 = vlog2.pop %v351
    %v369 = vmul.f32 %v368, 0.6931472
    %v370 = vlog2.pop %v352
    %v371 = vmul.f32 %v370, 0.6931472
    %v372 = vlog2.pop %v353
    %v373 = vmul.f32 %v372, 0.6931472
    %v374 = vlog2.pop %v354
    %v375 = vmul.f32 %v374, 0.6931472
    %v376 = vlog2.pop %v355
    %v377 = vmul.f32 %v376, 0.6931472
    %v378 = vlog2.pop %v356
    %v379 = vmul.f32 %v378, 0.6931472
    %v380 = vlog2.pop %v357
    %v381 = vmul.f32 %v380, 0.6931472
    %v382 = vsel %vm358, %v367, -1e+30
    %v383 = vsel %vm359, %v369, -1e+30
    %v384 = vsel %vm360, %v371, -1e+30
    %v385 = vsel %vm361, %v373, -1e+30
    %v386 = vsel %vm362, %v375, -1e+30
    %v387 = vsel %vm363, %v377, -1e+30
    %v388 = vsel %vm364, %v379, -1e+30
    %v389 = vsel %vm365, %v381, -1e+30
    %vm390 = vcmp.lt.f32.partialorder %v342, 0.0
    %vm391 = vcmp.lt.f32.partialorder %v343, 0.0
    %vm392 = vcmp.lt.f32.partialorder %v344, 0.0
    %vm393 = vcmp.lt.f32.partialorder %v345, 0.0
    %vm394 = vcmp.lt.f32.partialorder %v346, 0.0
    %vm395 = vcmp.lt.f32.partialorder %v347, 0.0
    %vm396 = vcmp.lt.f32.partialorder %v348, 0.0
    %vm397 = vcmp.lt.f32.partialorder %v349, 0.0
    %v398 = vsel %vm390, 1, 0
    %v399 = vsel %vm391, 1, 0
    %v400 = vsel %vm392, 1, 0
    %v401 = vsel %vm393, 1, 0
    %v402 = vsel %vm394, 1, 0
    %v403 = vsel %vm395, 1, 0
    %v404 = vsel %vm396, 1, 0
    %v405 = vsel %vm397, 1, 0
    %v406 = vcvt.s32.f32 %v398
    %v407 = vcvt.s32.f32 %v399
    %v408 = vcvt.s32.f32 %v400
    %v409 = vcvt.s32.f32 %v401
    %v410 = vcvt.s32.f32 %v402
    %v411 = vcvt.s32.f32 %v403
    %v412 = vcvt.s32.f32 %v404
    %v413 = vcvt.s32.f32 %v405
    %414 = vrot.lane.b32.xlu0 %v406, 8
    %v415 = vpop.permute.xlu0 %414
    %416 = vrot.lane.b32.xlu0 %v407, 8
    %v417 = vpop.permute.xlu0 %416
    %418 = vrot.lane.b32.xlu0 %v408, 8
    %v419 = vpop.permute.xlu0 %418
    %420 = vrot.lane.b32.xlu0 %v409, 8
    %v421 = vpop.permute.xlu0 %420
    %422 = vrot.lane.b32.xlu0 %v410, 8
    %v423 = vpop.permute.xlu0 %422
    %424 = vrot.lane.b32.xlu0 %v411, 8
    %v425 = vpop.permute.xlu0 %424
    %426 = vrot.lane.b32.xlu0 %v412, 8
    %v427 = vpop.permute.xlu0 %426
    %428 = vrot.lane.b32.xlu0 %v413, 8
    %v429 = vpop.permute.xlu0 %428
    %v430 = vlaneseq
    %v431 = vand.u32 %v430, 127
    %vm432 = vcmp.lt.s32.totalorder %v431, 33
    %vm433 = vcmp.lt.s32.totalorder %v431, 41
    %vm434 = vcmp.lt.s32.totalorder %v431, 49
    %v435 = vsel %vm434, %v415, 0.0
    %v436 = vsel %vm434, %v417, 0.0
    %v437 = vsel %vm434, %v419, 0.0
    %v438 = vsel %vm434, %v421, 0.0
    %v439 = vsel %vm434, %v423, 0.0
    %v440 = vsel %vm434, %v425, 0.0
    %v441 = vsel %vm434, %v427, 0.0
    %v442 = vsel %vm434, %v429, 0.0
    %v443 = vsel %vm433, %v382, %v435
    %v444 = vsel %vm433, %v383, %v436
    %v445 = vsel %vm433, %v384, %v437
    %v446 = vsel %vm433, %v385, %v438
    %v447 = vsel %vm433, %v386, %v439
    %v448 = vsel %vm433, %v387, %v440
    %v449 = vsel %vm433, %v388, %v441
    %v450 = vsel %vm433, %v389, %v442
    %v451 = vsel %vm432, %v290, %v443
    %v452 = vsel %vm432, %v295, %v444
    %v453 = vsel %vm432, %v300, %v445
    %v454 = vsel %vm432, %v305, %v446
    %v455 = vsel %vm432, %v310, %v447
    %v456 = vsel %vm432, %v315, %v448
    %v457 = vsel %vm432, %v320, %v449
    %v458 = vsel %vm432, %v325, %v450
    %vm459 = vcmask 523264
    %v461 = vsel %vm459, %v182, 0
    %v464 = vsel %vm459, %v183, 0
    %v467 = vsel %vm459, %v184, 0
    %v470 = vsel %vm459, %v185, 0
    %472 = vmatprep.subr.mxu0 0.0
    %473 = vmatpush1.msra.mxu0 %v451
    %474 = vmatprep.subr.mxu0 0.0
    %475 = vmatpush1.msra.mxu0 %v452
    %476 = vmatprep.subr.mxu0 0.0
    %477 = vmatpush1.msra.mxu0 %v453
    %478 = vmatprep.subr.mxu0 0.0
    %479 = vmatpush1.msra.mxu0 %v454
    %480 = vmatprep.subr.mxu0 0.0
    %481 = vmatpush1.msra.mxu0 %v455
    %482 = vmatprep.subr.mxu0 0.0
    %483 = vmatpush1.msra.mxu0 %v456
    %484 = vmatprep.subr.mxu0 0.0
    %485 = vmatpush1.msra.mxu0 %v457
    %486 = vmatprep.subr.mxu0 0.0
    %487 = vmatpush1.msra.mxu0 %v458
    %488 = vmatprep.subr.mxu0 0.0
    %489 = vmatpush1.msra.mxu0 0.0
    %490 = vmatprep.subr.mxu0 0.0
    %491 = vmatpush1.msra.mxu0 0.0
    %492 = vmatprep.subr.mxu0 0.0
    %493 = vmatpush1.msra.mxu0 0.0
    %494 = vmatprep.subr.mxu0 0.0
    %495 = vmatpush1.msra.mxu0 0.0
    %496 = vmatprep.subr.mxu0 0.0
    %497 = vmatpush1.msra.mxu0 0.0
    %498 = vmatprep.subr.mxu0 0.0
    %499 = vmatpush1.msra.mxu0 0.0
    %500 = vmatprep.subr.mxu0 0.0
    %501 = vmatpush1.msra.mxu0 0.0
    %502 = vmatprep.subr.mxu0 0.0
    %503 = vmatpush1.msra.mxu0 0.0
    %504 = vmatprep.subr.mxu0 0.0
    %505 = vmatpush1.msra.mxu0 0.0
    %506 = vmatprep.subr.mxu0 0.0
    %507 = vmatpush1.msra.mxu0 0.0
    %508 = vmatprep.subr.mxu0 0.0
    %509 = vmatpush1.msra.mxu0 0.0
    %510 = vmatprep.subr.mxu0 0.0
    %511 = vmatpush1.msra.mxu0 0.0
    %512 = vmatprep.subr.mxu0 0.0
    %513 = vmatpush1.msra.mxu0 0.0
    %514 = vmatprep.subr.mxu0 0.0
    %515 = vmatpush1.msra.mxu0 0.0
    %516 = vmatprep.subr.mxu0 0.0
    %517 = vmatpush1.msra.mxu0 0.0
    %518 = vmatprep.subr.mxu0 0.0
    %519 = vmatpush1.msra.mxu0 0.0
    %520 = vmatprep.subr.mxu0 0.0
    %521 = vmatpush1.msra.mxu0 0.0
    %522 = vmatprep.subr.mxu0 0.0
    %523 = vmatpush1.msra.mxu0 0.0
    %524 = vmatprep.subr.mxu0 0.0
    %525 = vmatpush1.msra.mxu0 0.0
    %526 = vmatprep.subr.mxu0 0.0
    %527 = vmatpush1.msra.mxu0 0.0
    %528 = vmatprep.subr.mxu0 0.0
    %529 = vmatpush1.msra.mxu0 0.0
    %530 = vmatprep.subr.mxu0 0.0
    %531 = vmatpush1.msra.mxu0 0.0
    %532 = vmatprep.subr.mxu0 0.0
    %533 = vmatpush1.msra.mxu0 0.0
    %534 = vmatprep.subr.mxu0 0.0
    %535 = vmatpush1.msra.mxu0 0.0
    %536 = vmatprep.mubr.f32.mxu0 0.0
    %537 = vmatmul.mubr.f32.gmra.mrb[0].mxu0 %v461
    %v538 = vpop.f32.mrb[0].mxu0
    %v539 = vadd.f32 0.0, %v538
    %v540 = vpop.f32.mrb[0].mxu0
    %541 = vmatprep.mubr.f32.mxu0 0.0
    %542 = vmatmul.mubr.f32.gmra.mrb[0].mxu0 %v464
    %v543 = vpop.f32.mrb[0].mxu0
    %v544 = vadd.f32 0.0, %v543
    %v545 = vpop.f32.mrb[0].mxu0
    %546 = vmatprep.mubr.f32.mxu0 0.0
    %547 = vmatmul.mubr.f32.gmra.mrb[0].mxu0 %v467
    %v548 = vpop.f32.mrb[0].mxu0
    %v549 = vadd.f32 0.0, %v548
    %v550 = vpop.f32.mrb[0].mxu0
    %551 = vmatprep.mubr.f32.mxu0 0.0
    %552 = vmatmul.mubr.f32.gmra.mrb[0].mxu0 %v470
    %v553 = vpop.f32.mrb[0].mxu0
    %v554 = vadd.f32 0.0, %v553
    %v555 = vpop.f32.mrb[0].mxu0
    %556 = vdwg.mxu0
    %vm557 = vcmp.ge.s32.totalorder %v431, 33
    %vm558 = vmand %vm557, %vm433
    %559 = vrot.lane.b32.xlu0 %v539, 120
    %v560 = vpop.permute.xlu0 %559
    %561 = vrot.lane.b32.xlu0 %v544, 120
    %v562 = vpop.permute.xlu0 %561
    %563 = vrot.lane.b32.xlu0 %v549, 120
    %v564 = vpop.permute.xlu0 %563
    %565 = vrot.lane.b32.xlu0 %v554, 120
    %v566 = vpop.permute.xlu0 %565
    %v567 = vmul.f32 %v560, 0.5
    %v568 = vmul.f32 %v562, 0.5
    %v569 = vmul.f32 %v564, 0.5
    %v570 = vmul.f32 %v566, 0.5
    %v571 = vfloor.f32 %v567
    %v572 = vfloor.f32 %v568
    %v573 = vfloor.f32 %v569
    %v574 = vfloor.f32 %v570
    %v575 = vmul.f32 %v571, 2.0
    %v576 = vmul.f32 %v572, 2.0
    %v577 = vmul.f32 %v573, 2.0
    %v578 = vmul.f32 %v574, 2.0
    %v579 = vsub.f32 %v560, %v575
    %v580 = vsub.f32 %v562, %v576
    %v581 = vsub.f32 %v564, %v577
    %v582 = vsub.f32 %v566, %v578
    %v583 = vmul.f32 %v579, 2.0
    %v584 = vmul.f32 %v580, 2.0
    %v585 = vmul.f32 %v581, 2.0
    %v586 = vmul.f32 %v582, 2.0
    %v587 = vsub.f32 1.0, %v583
    %v588 = vsub.f32 1.0, %v584
    %v589 = vsub.f32 1.0, %v585
    %v590 = vsub.f32 1.0, %v586
    %v591 = vsel %vm558, %v539, -1e+30
    %v592 = vsel %vm558, %v544, -1e+30
    %v593 = vsel %vm558, %v549, -1e+30
    %v594 = vsel %vm558, %v554, -1e+30
    %v595 = vmul.f32 %v591, 1.442695
    %v596 = vpow.pop %v595
    %v597 = vmul.f32 %v592, 1.442695
    %v598 = vpow.pop %v597
    %v599 = vmul.f32 %v593, 1.442695
    %v600 = vpow.pop %v599
    %v601 = vmul.f32 %v594, 1.442695
    %v602 = vpow.pop %v601
    %v603 = vmul.f32 %v587, %v596
    %v604 = vmul.f32 %v588, %v598
    %v605 = vmul.f32 %v589, %v600
    %v606 = vmul.f32 %v590, %v602
    %607 = vmatprep.subr.mxu0 0.0
    %608 = vmatpush1.msra.mxu0 %v207
    %609 = vmatprep.subr.mxu0 0.0
    %610 = vmatpush1.msra.mxu0 %v208
    %611 = vmatprep.subr.mxu0 0.0
    %612 = vmatpush1.msra.mxu0 %v209
    %613 = vmatprep.subr.mxu0 0.0
    %614 = vmatpush1.msra.mxu0 %v210
    %615 = vmatprep.subr.mxu0 0.0
    %616 = vmatpush1.msra.mxu0 %v211
    %617 = vmatprep.subr.mxu0 0.0
    %618 = vmatpush1.msra.mxu0 %v212
    %619 = vmatprep.subr.mxu0 0.0
    %620 = vmatpush1.msra.mxu0 %v213
    %621 = vmatprep.subr.mxu0 0.0
    %622 = vmatpush1.msra.mxu0 %v214
    %623 = vmatprep.subr.mxu0 0.0
    %624 = vmatpush1.msra.mxu0 %v215
    %625 = vmatprep.subr.mxu0 0.0
    %626 = vmatpush1.msra.mxu0 %v216
    %627 = vmatprep.subr.mxu0 0.0
    %628 = vmatpush1.msra.mxu0 %v217
    %629 = vmatprep.subr.mxu0 0.0
    %630 = vmatpush1.msra.mxu0 %v218
    %631 = vmatprep.subr.mxu0 0.0
    %632 = vmatpush1.msra.mxu0 %v219
    %633 = vmatprep.subr.mxu0 0.0
    %634 = vmatpush1.msra.mxu0 %v220
    %635 = vmatprep.subr.mxu0 0.0
    %636 = vmatpush1.msra.mxu0 %v221
    %637 = vmatprep.subr.mxu0 0.0
    %638 = vmatpush1.msra.mxu0 %v222
    %639 = vmatprep.subr.mxu0 0.0
    %640 = vmatpush1.msra.mxu0 0.0
    %641 = vmatprep.subr.mxu0 0.0
    %642 = vmatpush1.msra.mxu0 0.0
    %643 = vmatprep.subr.mxu0 0.0
    %644 = vmatpush1.msra.mxu0 0.0
    %645 = vmatprep.subr.mxu0 0.0
    %646 = vmatpush1.msra.mxu0 0.0
    %647 = vmatprep.subr.mxu0 0.0
    %648 = vmatpush1.msra.mxu0 0.0
    %649 = vmatprep.subr.mxu0 0.0
    %650 = vmatpush1.msra.mxu0 0.0
    %651 = vmatprep.subr.mxu0 0.0
    %652 = vmatpush1.msra.mxu0 0.0
    %653 = vmatprep.subr.mxu0 0.0
    %654 = vmatpush1.msra.mxu0 0.0
    %655 = vmatprep.subr.mxu0 0.0
    %656 = vmatpush1.msra.mxu0 0.0
    %657 = vmatprep.subr.mxu0 0.0
    %658 = vmatpush1.msra.mxu0 0.0
    %659 = vmatprep.subr.mxu0 0.0
    %660 = vmatpush1.msra.mxu0 0.0
    %661 = vmatprep.subr.mxu0 0.0
    %662 = vmatpush1.msra.mxu0 0.0
    %663 = vmatprep.subr.mxu0 0.0
    %664 = vmatpush1.msra.mxu0 0.0
    %665 = vmatprep.subr.mxu0 0.0
    %666 = vmatpush1.msra.mxu0 0.0
    %667 = vmatprep.subr.mxu0 0.0
    %668 = vmatpush1.msra.mxu0 0.0
    %669 = vmatprep.subr.mxu0 0.0
    %670 = vmatpush1.msra.mxu0 0.0
    %671 = vmatprep.mubr.f32.mxu0 0.0
    %672 = vmatmul.mubr.f32.gmra.mrb[0].mxu0 %v603
    %v673 = vpop.f32.mrb[0].mxu0
    %v674 = vadd.f32 0.0, %v673
    %v675 = vpop.f32.mrb[0].mxu0
    %676 = vmatprep.mubr.f32.mxu0 0.0
    %677 = vmatmul.mubr.f32.gmra.mrb[0].mxu0 %v604
    %v678 = vpop.f32.mrb[0].mxu0
    %v679 = vadd.f32 0.0, %v678
    %v680 = vpop.f32.mrb[0].mxu0
    %681 = vmatprep.mubr.f32.mxu0 0.0
    %682 = vmatmul.mubr.f32.gmra.mrb[0].mxu0 %v605
    %v683 = vpop.f32.mrb[0].mxu0
    %v684 = vadd.f32 0.0, %v683
    %v685 = vpop.f32.mrb[0].mxu0
    %686 = vmatprep.mubr.f32.mxu0 0.0
    %687 = vmatmul.mubr.f32.gmra.mrb[0].mxu0 %v606
    %v688 = vpop.f32.mrb[0].mxu0
    %v689 = vadd.f32 0.0, %v688
    %v690 = vpop.f32.mrb[0].mxu0
    %691 = vdwg.mxu0
    %v692 = vxor.u32 %v674, 2147483648
    %v693 = vxor.u32 %v679, 2147483648
    %v694 = vxor.u32 %v684, 2147483648
    %v695 = vxor.u32 %v689, 2147483648
    %v696 = vmul.f32 %v692, 1.442695
    %v697 = vpow.pop %v696
    %v698 = vmul.f32 %v693, 1.442695
    %v699 = vpow.pop %v698
    %v700 = vmul.f32 %v694, 1.442695
    %v701 = vpow.pop %v700
    %v702 = vmul.f32 %v695, 1.442695
    %v703 = vpow.pop %v702
    %v704 = vadd.f32 %v697, 1.0
    %v705 = vadd.f32 %v699, 1.0
    %v706 = vadd.f32 %v701, 1.0
    %v707 = vadd.f32 %v703, 1.0
    %v708 = vrcp.pop %v704
    %v709 = vmul.f32 1.0, %v708
    %v710 = vrcp.pop %v705
    %v711 = vmul.f32 1.0, %v710
    %v712 = vrcp.pop %v706
    %v713 = vmul.f32 1.0, %v712
    %v714 = vrcp.pop %v707
    %v715 = vmul.f32 1.0, %v714
    %v716 = vxor.u32 %v539, 2147483648
    %v717 = vxor.u32 %v544, 2147483648
    %v718 = vxor.u32 %v549, 2147483648
    %v719 = vxor.u32 %v554, 2147483648
    %v720 = vmul.f32 %v716, 1.442695
    %v721 = vpow.pop %v720
    %v722 = vmul.f32 %v717, 1.442695
    %v723 = vpow.pop %v722
    %v724 = vmul.f32 %v718, 1.442695
    %v725 = vpow.pop %v724
    %v726 = vmul.f32 %v719, 1.442695
    %v727 = vpow.pop %v726
    %v728 = vadd.f32 %v721, 1.0
    %v729 = vadd.f32 %v723, 1.0
    %v730 = vadd.f32 %v725, 1.0
    %v731 = vadd.f32 %v727, 1.0
    %v732 = vrcp.pop %v728
    %v733 = vmul.f32 1.0, %v732
    %v734 = vrcp.pop %v729
    %v735 = vmul.f32 1.0, %v734
    %v736 = vrcp.pop %v730
    %v737 = vmul.f32 1.0, %v736
    %v738 = vrcp.pop %v731
    %v739 = vmul.f32 1.0, %v738
    %v740 = vstv %s186
    %v741 = vmul.f32 %v709, %v740
    %v742 = vmul.f32 %v711, %v740
    %v743 = vmul.f32 %v713, %v740
    %v744 = vmul.f32 %v715, %v740
    %v745 = vstv %s187
    %v746 = vmul.f32 %v733, %v745
    %v747 = vmul.f32 %v735, %v745
    %v748 = vmul.f32 %v737, %v745
    %v749 = vmul.f32 %v739, %v745
    %v750 = vadd.f32 %v741, %v746
    %v751 = vadd.f32 %v742, %v747
    %v752 = vadd.f32 %v743, %v748
    %v753 = vadd.f32 %v744, %v749
    %v754 = vmul.f32 %v750, 0.5
    %v755 = vmul.f32 %v751, 0.5
    %v756 = vmul.f32 %v752, 0.5
    %v757 = vmul.f32 %v753, 0.5
    %v758 = vstv %s188
    %v759 = vmul.f32 %v709, %v758
    %v760 = vmul.f32 %v711, %v758
    %v761 = vmul.f32 %v713, %v758
    %v762 = vmul.f32 %v715, %v758
    %v763 = vstv %s189
    %v764 = vmul.f32 %v733, %v763
    %v765 = vmul.f32 %v735, %v763
    %v766 = vmul.f32 %v737, %v763
    %v767 = vmul.f32 %v739, %v763
    %v768 = vadd.f32 %v759, %v764
    %v769 = vadd.f32 %v760, %v765
    %v770 = vadd.f32 %v761, %v766
    %v771 = vadd.f32 %v762, %v767
    %v772 = vmul.f32 %v768, 0.5
    %v773 = vmul.f32 %v769, 0.5
    %v774 = vmul.f32 %v770, 0.5
    %v775 = vmul.f32 %v771, 0.5
    %v776 = vmax.f32 %v754, %v772
    %v777 = vmax.f32 %v755, %v773
    %v778 = vmax.f32 %v756, %v774
    %v779 = vmax.f32 %v757, %v775
    %v780 = vsub.f32 %v754, %v776
    %v781 = vsub.f32 %v755, %v777
    %v782 = vsub.f32 %v756, %v778
    %v783 = vsub.f32 %v757, %v779
    %v784 = vmul.f32 %v780, 1.442695
    %v785 = vpow.pop %v784
    %v786 = vmul.f32 %v781, 1.442695
    %v787 = vpow.pop %v786
    %v788 = vmul.f32 %v782, 1.442695
    %v789 = vpow.pop %v788
    %v790 = vmul.f32 %v783, 1.442695
    %v791 = vpow.pop %v790
    %v792 = vsub.f32 %v772, %v776
    %v793 = vsub.f32 %v773, %v777
    %v794 = vsub.f32 %v774, %v778
    %v795 = vsub.f32 %v775, %v779
    %v796 = vmul.f32 %v792, 1.442695
    %v797 = vpow.pop %v796
    %v798 = vmul.f32 %v793, 1.442695
    %v799 = vpow.pop %v798
    %v800 = vmul.f32 %v794, 1.442695
    %v801 = vpow.pop %v800
    %v802 = vmul.f32 %v795, 1.442695
    %v803 = vpow.pop %v802
    %v804 = vadd.f32 %v785, %v797
    %v805 = vadd.f32 %v787, %v799
    %v806 = vadd.f32 %v789, %v801
    %v807 = vadd.f32 %v791, %v803
    %v808 = vrcp.pop %v804
    %v809 = vrcp.pop %v805
    %v810 = vrcp.pop %v806
    %v811 = vrcp.pop %v807
    %v812 = vmul.f32 %v785, %v808
    %v813 = vmul.f32 %v787, %v809
    %v814 = vmul.f32 %v789, %v810
    %v815 = vmul.f32 %v791, %v811
    %817 = vset.pattern.permute.xlu0 32
    %818 = vperm.xlu0 %817, %v812
    %v819 = vpop.permute.xlu0 %818
    %822 = vset.pattern.permute.xlu0 32
    %823 = vperm.xlu0 %822, %v813
    %v824 = vpop.permute.xlu0 %823
    %827 = vset.pattern.permute.xlu0 32
    %828 = vperm.xlu0 %827, %v814
    %v829 = vpop.permute.xlu0 %828
    %832 = vset.pattern.permute.xlu0 32
    %833 = vperm.xlu0 %832, %v815
    %v834 = vpop.permute.xlu0 %833
    %v836 = vmul.f32 %v819, %v674
    %v837 = vmul.f32 %v824, %v679
    %v838 = vmul.f32 %v829, %v684
    %v839 = vmul.f32 %v834, %v689
    %v840 = vmul.f32 %v797, %v808
    %v841 = vmul.f32 %v799, %v809
    %v842 = vmul.f32 %v801, %v810
    %v843 = vmul.f32 %v803, %v811
    %845 = vset.pattern.permute.xlu0 32
    %846 = vperm.xlu0 %845, %v840
    %v847 = vpop.permute.xlu0 %846
    %850 = vset.pattern.permute.xlu0 32
    %851 = vperm.xlu0 %850, %v841
    %v852 = vpop.permute.xlu0 %851
    %855 = vset.pattern.permute.xlu0 32
    %856 = vperm.xlu0 %855, %v842
    %v857 = vpop.permute.xlu0 %856
    %860 = vset.pattern.permute.xlu0 32
    %861 = vperm.xlu0 %860, %v843
    %v862 = vpop.permute.xlu0 %861
    %v864 = vmul.f32 %v847, %v539
    %v865 = vmul.f32 %v852, %v544
    %v866 = vmul.f32 %v857, %v549
    %v867 = vmul.f32 %v862, %v554
    %v868 = vadd.f32 %v836, %v864
    %v869 = vadd.f32 %v837, %v865
    %v870 = vadd.f32 %v838, %v866
    %v871 = vadd.f32 %v839, %v867
    %v872 = vmax.f32 %v868, 0.0
    %v873 = vmax.f32 %v869, 0.0
    %v874 = vmax.f32 %v870, 0.0
    %v875 = vmax.f32 %v871, 0.0
    %v876 = vld [vmem:[%s5] sm:$0xf]
    %v877 = vld [vmem:[%s5 + $0x4] sm:$0xf]
    %v878 = vunpack.c.l.bf16 %v876
    %v879 = vunpack.c.l.bf16 %v877
    %s880 = sld [smem:[#allocation17 + $0x4]]
    %s881 = sld [smem:[#allocation17 + $0x5]]
    %s882 = sld [smem:[#allocation17 + $0x6]]
    %s883 = sld [smem:[#allocation17 + $0x7]]
    %v884 = vld [vmem:[#allocation11] sm:$0xff]
    %v885 = vld [vmem:[#allocation11 + $0x8] sm:$0xff]
    %v886 = vld [vmem:[#allocation11 + $0x10] sm:$0xff]
    %v887 = vld [vmem:[#allocation11 + $0x18] sm:$0xff]
    %v888 = vld [vmem:[#allocation11 + $0x20] sm:$0xff]
    %v889 = vld [vmem:[#allocation11 + $0x28] sm:$0xff]
    %v890 = vld [vmem:[#allocation11 + $0x30] sm:$0xff]
    %v891 = vld [vmem:[#allocation11 + $0x38] sm:$0xff]
    %v892 = vld [vmem:[#allocation11 + $0x40] sm:$0xff]
    %v893 = vld [vmem:[#allocation11 + $0x48] sm:$0xff]
    %v894 = vld [vmem:[#allocation11 + $0x50] sm:$0xff]
    %v895 = vld [vmem:[#allocation11 + $0x58] sm:$0xff]
    %v896 = vld [vmem:[#allocation11 + $0x60] sm:$0xff]
    %v897 = vld [vmem:[#allocation11 + $0x68] sm:$0xff]
    %v898 = vld [vmem:[#allocation11 + $0x70] sm:$0xff]
    %v899 = vld [vmem:[#allocation11 + $0x78] sm:$0xff]
    %v900 = vld [vmem:[%s7] sm:$0x1]
    %v901 = vld [vmem:[#allocation12] sm:$0xff]
    %v902 = vld [vmem:[#allocation12 + $0x8] sm:$0xff]
    %v903 = vld [vmem:[#allocation12 + $0x10] sm:$0xff]
    %v904 = vld [vmem:[#allocation12 + $0x18] sm:$0xff]
    %v905 = vld [vmem:[#allocation12 + $0x20] sm:$0xff]
    %v906 = vld [vmem:[#allocation12 + $0x28] sm:$0xff]
    %v907 = vld [vmem:[#allocation12 + $0x30] sm:$0xff]
    %v908 = vld [vmem:[#allocation12 + $0x38] sm:$0xff]
    %v909 = vld [vmem:[#allocation12 + $0x40] sm:$0xff]
    %v910 = vld [vmem:[#allocation12 + $0x48] sm:$0xff]
    %v911 = vld [vmem:[#allocation12 + $0x50] sm:$0xff]
    %v912 = vld [vmem:[#allocation12 + $0x58] sm:$0xff]
    %v913 = vld [vmem:[#allocation12 + $0x60] sm:$0xff]
    %v914 = vld [vmem:[#allocation12 + $0x68] sm:$0xff]
    %v915 = vld [vmem:[#allocation12 + $0x70] sm:$0xff]
    %v916 = vld [vmem:[#allocation12 + $0x78] sm:$0xff]
    %917 = vmatprep.subr.mxu0 0.0
    %918 = vmatpush1.msra.mxu0 %v884
    %919 = vmatprep.subr.mxu0 0.0
    %920 = vmatpush1.msra.mxu0 %v885
    %921 = vmatprep.subr.mxu0 0.0
    %922 = vmatpush1.msra.mxu0 %v886
    %923 = vmatprep.subr.mxu0 0.0
    %924 = vmatpush1.msra.mxu0 %v887
    %925 = vmatprep.subr.mxu0 0.0
    %926 = vmatpush1.msra.mxu0 %v888
    %927 = vmatprep.subr.mxu0 0.0
    %928 = vmatpush1.msra.mxu0 %v889
    %929 = vmatprep.subr.mxu0 0.0
    %930 = vmatpush1.msra.mxu0 %v890
    %931 = vmatprep.subr.mxu0 0.0
    %932 = vmatpush1.msra.mxu0 %v891
    %933 = vmatprep.subr.mxu0 0.0
    %934 = vmatpush1.msra.mxu0 %v892
    %935 = vmatprep.subr.mxu0 0.0
    %936 = vmatpush1.msra.mxu0 %v893
    %937 = vmatprep.subr.mxu0 0.0
    %938 = vmatpush1.msra.mxu0 %v894
    %939 = vmatprep.subr.mxu0 0.0
    %940 = vmatpush1.msra.mxu0 %v895
    %941 = vmatprep.subr.mxu0 0.0
    %942 = vmatpush1.msra.mxu0 %v896
    %943 = vmatprep.subr.mxu0 0.0
    %944 = vmatpush1.msra.mxu0 %v897
    %945 = vmatprep.subr.mxu0 0.0
    %946 = vmatpush1.msra.mxu0 %v898
    %947 = vmatprep.subr.mxu0 0.0
    %948 = vmatpush1.msra.mxu0 %v899
    %949 = vmatprep.subr.mxu0 0.0
    %950 = vmatpush1.msra.mxu0 0.0
    %951 = vmatprep.subr.mxu0 0.0
    %952 = vmatpush1.msra.mxu0 0.0
    %953 = vmatprep.subr.mxu0 0.0
    %954 = vmatpush1.msra.mxu0 0.0
    %955 = vmatprep.subr.mxu0 0.0
    %956 = vmatpush1.msra.mxu0 0.0
    %957 = vmatprep.subr.mxu0 0.0
    %958 = vmatpush1.msra.mxu0 0.0
    %959 = vmatprep.subr.mxu0 0.0
    %960 = vmatpush1.msra.mxu0 0.0
    %961 = vmatprep.subr.mxu0 0.0
    %962 = vmatpush1.msra.mxu0 0.0
    %963 = vmatprep.subr.mxu0 0.0
    %964 = vmatpush1.msra.mxu0 0.0
    %965 = vmatprep.subr.mxu0 0.0
    %966 = vmatpush1.msra.mxu0 0.0
    %967 = vmatprep.subr.mxu0 0.0
    %968 = vmatpush1.msra.mxu0 0.0
    %969 = vmatprep.subr.mxu0 0.0
    %970 = vmatpush1.msra.mxu0 0.0
    %971 = vmatprep.subr.mxu0 0.0
    %972 = vmatpush1.msra.mxu0 0.0
    %973 = vmatprep.subr.mxu0 0.0
    %974 = vmatpush1.msra.mxu0 0.0
    %975 = vmatprep.subr.mxu0 0.0
    %976 = vmatpush1.msra.mxu0 0.0
    %977 = vmatprep.subr.mxu0 0.0
    %978 = vmatpush1.msra.mxu0 0.0
    %979 = vmatprep.subr.mxu0 0.0
    %980 = vmatpush1.msra.mxu0 0.0
    %981 = vmatprep.mubr.f32.mxu0 0.0
    %982 = vmatmul.mubr.f32.gmra.mrb[0].mxu0 %v872
    %v983 = vpop.f32.mrb[0].mxu0
    %v984 = vadd.f32 0.0, %v983
    %v985 = vpop.f32.mrb[0].mxu0
    %986 = vmatprep.mubr.f32.mxu0 0.0
    %987 = vmatmul.mubr.f32.gmra.mrb[0].mxu0 %v873
    %v988 = vpop.f32.mrb[0].mxu0
    %v989 = vadd.f32 0.0, %v988
    %v990 = vpop.f32.mrb[0].mxu0
    %991 = vmatprep.mubr.f32.mxu0 0.0
    %992 = vmatmul.mubr.f32.gmra.mrb[0].mxu0 %v874
    %v993 = vpop.f32.mrb[0].mxu0
    %v994 = vadd.f32 0.0, %v993
    %v995 = vpop.f32.mrb[0].mxu0
    %996 = vmatprep.mubr.f32.mxu0 0.0
    %997 = vmatmul.mubr.f32.gmra.mrb[0].mxu0 %v875
    %v998 = vpop.f32.mrb[0].mxu0
    %v999 = vadd.f32 0.0, %v998
    %v1000 = vpop.f32.mrb[0].mxu0
    %1001 = vdwg.mxu0
    %v1003 = vlaneseq
    %v1004 = vshrl.u32 %v1003, 7
    %v1005 = vsub.s32 0, %v1004
    %v1006 = vrot.slane %v900, %v1005
    %v1008 = vadd.f32 %v984, %v1006
    %v1009 = vadd.f32 %v989, %v1006
    %v1010 = vadd.f32 %v994, %v1006
    %v1011 = vadd.f32 %v999, %v1006
    %v1012 = vtanh.pop %v1008
    %v1013 = vtanh.pop %v1009
    %v1014 = vtanh.pop %v1010
    %v1015 = vtanh.pop %v1011
    %v1016 = vand.u32 2147483647, %v1012
    %v1017 = vand.u32 2147483647, %v1013
    %v1018 = vand.u32 2147483647, %v1014
    %v1019 = vand.u32 2147483647, %v1015
    %vm1020 = vcmp.gt.f32.partialorder %v1016, 0.0
    %vm1021 = vcmp.gt.f32.partialorder %v1017, 0.0
    %vm1022 = vcmp.gt.f32.partialorder %v1018, 0.0
    %vm1023 = vcmp.gt.f32.partialorder %v1019, 0.0
    %v1024 = vlog2.pop %v1016
    %v1025 = vmul.f32 %v1024, 0.6931472
    %v1026 = vlog2.pop %v1017
    %v1027 = vmul.f32 %v1026, 0.6931472
    %v1028 = vlog2.pop %v1018
    %v1029 = vmul.f32 %v1028, 0.6931472
    %v1030 = vlog2.pop %v1019
    %v1031 = vmul.f32 %v1030, 0.6931472
    %v1032 = vsel %vm1020, %v1025, -1e+30
    %v1033 = vsel %vm1021, %v1027, -1e+30
    %v1034 = vsel %vm1022, %v1029, -1e+30
    %v1035 = vsel %vm1023, %v1031, -1e+30
    %vm1036 = vcmp.lt.f32.partialorder %v1012, 0.0
    %vm1037 = vcmp.lt.f32.partialorder %v1013, 0.0
    %vm1038 = vcmp.lt.f32.partialorder %v1014, 0.0
    %vm1039 = vcmp.lt.f32.partialorder %v1015, 0.0
    %v1040 = vsel %vm1036, 1, 0
    %v1041 = vsel %vm1037, 1, 0
    %v1042 = vsel %vm1038, 1, 0
    %v1043 = vsel %vm1039, 1, 0
    %v1044 = vcvt.s32.f32 %v1040
    %v1045 = vcvt.s32.f32 %v1041
    %v1046 = vcvt.s32.f32 %v1042
    %v1047 = vcvt.s32.f32 %v1043
    %1048 = vrot.lane.b32.xlu0 %v1044, 8
    %v1049 = vpop.permute.xlu0 %1048
    %1050 = vrot.lane.b32.xlu0 %v1045, 8
    %v1051 = vpop.permute.xlu0 %1050
    %1052 = vrot.lane.b32.xlu0 %v1046, 8
    %v1053 = vpop.permute.xlu0 %1052
    %1054 = vrot.lane.b32.xlu0 %v1047, 8
    %v1055 = vpop.permute.xlu0 %1054
    %v1056 = vsel %vm434, %v1049, 0.0
    %v1057 = vsel %vm434, %v1051, 0.0
    %v1058 = vsel %vm434, %v1053, 0.0
    %v1059 = vsel %vm434, %v1055, 0.0
    %v1060 = vsel %vm433, %v1032, %v1056
    %v1061 = vsel %vm433, %v1033, %v1057
    %v1062 = vsel %vm433, %v1034, %v1058
    %v1063 = vsel %vm433, %v1035, %v1059
    %v1064 = vsel %vm432, %v984, %v1060
    %v1065 = vsel %vm432, %v989, %v1061
    %v1066 = vsel %vm432, %v994, %v1062
    %v1067 = vsel %vm432, %v999, %v1063
    %vm1068 = vcmask 261120
    %v1070 = vsel %vm1068, %v878, 0
    %v1073 = vsel %vm1068, %v879, 0
    %1075 = vmatprep.subr.mxu0 0.0
    %1076 = vmatpush1.msra.mxu0 %v1064
    %1077 = vmatprep.subr.mxu0 0.0
    %1078 = vmatpush1.msra.mxu0 %v1065
    %1079 = vmatprep.subr.mxu0 0.0
    %1080 = vmatpush1.msra.mxu0 %v1066
    %1081 = vmatprep.subr.mxu0 0.0
    %1082 = vmatpush1.msra.mxu0 %v1067
    %1083 = vmatprep.subr.mxu0 0.0
    %1084 = vmatpush1.msra.mxu0 0.0
    %1085 = vmatprep.subr.mxu0 0.0
    %1086 = vmatpush1.msra.mxu0 0.0
    %1087 = vmatprep.subr.mxu0 0.0
    %1088 = vmatpush1.msra.mxu0 0.0
    %1089 = vmatprep.subr.mxu0 0.0
    %1090 = vmatpush1.msra.mxu0 0.0
    %1091 = vmatprep.subr.mxu0 0.0
    %1092 = vmatpush1.msra.mxu0 0.0
    %1093 = vmatprep.subr.mxu0 0.0
    %1094 = vmatpush1.msra.mxu0 0.0
    %1095 = vmatprep.subr.mxu0 0.0
    %1096 = vmatpush1.msra.mxu0 0.0
    %1097 = vmatprep.subr.mxu0 0.0
    %1098 = vmatpush1.msra.mxu0 0.0
    %1099 = vmatprep.subr.mxu0 0.0
    %1100 = vmatpush1.msra.mxu0 0.0
    %1101 = vmatprep.subr.mxu0 0.0
    %1102 = vmatpush1.msra.mxu0 0.0
    %1103 = vmatprep.subr.mxu0 0.0
    %1104 = vmatpush1.msra.mxu0 0.0
    %1105 = vmatprep.subr.mxu0 0.0
    %1106 = vmatpush1.msra.mxu0 0.0
    %1107 = vmatprep.subr.mxu0 0.0
    %1108 = vmatpush1.msra.mxu0 0.0
    %1109 = vmatprep.subr.mxu0 0.0
    %1110 = vmatpush1.msra.mxu0 0.0
    %1111 = vmatprep.subr.mxu0 0.0
    %1112 = vmatpush1.msra.mxu0 0.0
    %1113 = vmatprep.subr.mxu0 0.0
    %1114 = vmatpush1.msra.mxu0 0.0
    %1115 = vmatprep.subr.mxu0 0.0
    %1116 = vmatpush1.msra.mxu0 0.0
    %1117 = vmatprep.subr.mxu0 0.0
    %1118 = vmatpush1.msra.mxu0 0.0
    %1119 = vmatprep.subr.mxu0 0.0
    %1120 = vmatpush1.msra.mxu0 0.0
    %1121 = vmatprep.subr.mxu0 0.0
    %1122 = vmatpush1.msra.mxu0 0.0
    %1123 = vmatprep.subr.mxu0 0.0
    %1124 = vmatpush1.msra.mxu0 0.0
    %1125 = vmatprep.subr.mxu0 0.0
    %1126 = vmatpush1.msra.mxu0 0.0
    %1127 = vmatprep.subr.mxu0 0.0
    %1128 = vmatpush1.msra.mxu0 0.0
    %1129 = vmatprep.subr.mxu0 0.0
    %1130 = vmatpush1.msra.mxu0 0.0
    %1131 = vmatprep.subr.mxu0 0.0
    %1132 = vmatpush1.msra.mxu0 0.0
    %1133 = vmatprep.subr.mxu0 0.0
    %1134 = vmatpush1.msra.mxu0 0.0
    %1135 = vmatprep.subr.mxu0 0.0
    %1136 = vmatpush1.msra.mxu0 0.0
    %1137 = vmatprep.subr.mxu0 0.0
    %1138 = vmatpush1.msra.mxu0 0.0
    %1139 = vmatprep.mubr.f32.mxu0 0.0
    %1140 = vmatmul.mubr.f32.gmra.mrb[0].mxu0 %v1070
    %v1141 = vpop.f32.mrb[0].mxu0
    %v1142 = vadd.f32 0.0, %v1141
    %v1143 = vpop.f32.mrb[0].mxu0
    %1144 = vmatprep.mubr.f32.mxu0 0.0
    %1145 = vmatmul.mubr.f32.gmra.mrb[0].mxu0 %v1073
    %v1146 = vpop.f32.mrb[0].mxu0
    %v1147 = vadd.f32 0.0, %v1146
    %v1148 = vpop.f32.mrb[0].mxu0
    %1149 = vdwg.mxu0
    %1150 = vrot.lane.b32.xlu0 %v1142, 120
    %v1151 = vpop.permute.xlu0 %1150
    %1152 = vrot.lane.b32.xlu0 %v1147, 120
    %v1153 = vpop.permute.xlu0 %1152
    %v1154 = vmul.f32 %v1151, 0.5
    %v1155 = vmul.f32 %v1153, 0.5
    %v1156 = vfloor.f32 %v1154
    %v1157 = vfloor.f32 %v1155
    %v1158 = vmul.f32 %v1156, 2.0
    %v1159 = vmul.f32 %v1157, 2.0
    %v1160 = vsub.f32 %v1151, %v1158
    %v1161 = vsub.f32 %v1153, %v1159
    %v1162 = vmul.f32 %v1160, 2.0
    %v1163 = vmul.f32 %v1161, 2.0
    %v1164 = vsub.f32 1.0, %v1162
    %v1165 = vsub.f32 1.0, %v1163
    %v1166 = vsel %vm558, %v1142, -1e+30
    %v1167 = vsel %vm558, %v1147, -1e+30
    %v1168 = vmul.f32 %v1166, 1.442695
    %v1169 = vpow.pop %v1168
    %v1170 = vmul.f32 %v1167, 1.442695
    %v1171 = vpow.pop %v1170
    %v1172 = vmul.f32 %v1164, %v1169
    %v1173 = vmul.f32 %v1165, %v1171
    %1174 = vmatprep.subr.mxu0 0.0
    %1175 = vmatpush1.msra.mxu0 %v901
    %1176 = vmatprep.subr.mxu0 0.0
    %1177 = vmatpush1.msra.mxu0 %v902
    %1178 = vmatprep.subr.mxu0 0.0
    %1179 = vmatpush1.msra.mxu0 %v903
    %1180 = vmatprep.subr.mxu0 0.0
    %1181 = vmatpush1.msra.mxu0 %v904
    %1182 = vmatprep.subr.mxu0 0.0
    %1183 = vmatpush1.msra.mxu0 %v905
    %1184 = vmatprep.subr.mxu0 0.0
    %1185 = vmatpush1.msra.mxu0 %v906
    %1186 = vmatprep.subr.mxu0 0.0
    %1187 = vmatpush1.msra.mxu0 %v907
    %1188 = vmatprep.subr.mxu0 0.0
    %1189 = vmatpush1.msra.mxu0 %v908
    %1190 = vmatprep.subr.mxu0 0.0
    %1191 = vmatpush1.msra.mxu0 %v909
    %1192 = vmatprep.subr.mxu0 0.0
    %1193 = vmatpush1.msra.mxu0 %v910
    %1194 = vmatprep.subr.mxu0 0.0
    %1195 = vmatpush1.msra.mxu0 %v911
    %1196 = vmatprep.subr.mxu0 0.0
    %1197 = vmatpush1.msra.mxu0 %v912
    %1198 = vmatprep.subr.mxu0 0.0
    %1199 = vmatpush1.msra.mxu0 %v913
    %1200 = vmatprep.subr.mxu0 0.0
    %1201 = vmatpush1.msra.mxu0 %v914
    %1202 = vmatprep.subr.mxu0 0.0
    %1203 = vmatpush1.msra.mxu0 %v915
    %1204 = vmatprep.subr.mxu0 0.0
    %1205 = vmatpush1.msra.mxu0 %v916
    %1206 = vmatprep.subr.mxu0 0.0
    %1207 = vmatpush1.msra.mxu0 0.0
    %1208 = vmatprep.subr.mxu0 0.0
    %1209 = vmatpush1.msra.mxu0 0.0
    %1210 = vmatprep.subr.mxu0 0.0
    %1211 = vmatpush1.msra.mxu0 0.0
    %1212 = vmatprep.subr.mxu0 0.0
    %1213 = vmatpush1.msra.mxu0 0.0
    %1214 = vmatprep.subr.mxu0 0.0
    %1215 = vmatpush1.msra.mxu0 0.0
    %1216 = vmatprep.subr.mxu0 0.0
    %1217 = vmatpush1.msra.mxu0 0.0
    %1218 = vmatprep.subr.mxu0 0.0
    %1219 = vmatpush1.msra.mxu0 0.0
    %1220 = vmatprep.subr.mxu0 0.0
    %1221 = vmatpush1.msra.mxu0 0.0
    %1222 = vmatprep.subr.mxu0 0.0
    %1223 = vmatpush1.msra.mxu0 0.0
    %1224 = vmatprep.subr.mxu0 0.0
    %1225 = vmatpush1.msra.mxu0 0.0
    %1226 = vmatprep.subr.mxu0 0.0
    %1227 = vmatpush1.msra.mxu0 0.0
    %1228 = vmatprep.subr.mxu0 0.0
    %1229 = vmatpush1.msra.mxu0 0.0
    %1230 = vmatprep.subr.mxu0 0.0
    %1231 = vmatpush1.msra.mxu0 0.0
    %1232 = vmatprep.subr.mxu0 0.0
    %1233 = vmatpush1.msra.mxu0 0.0
    %1234 = vmatprep.subr.mxu0 0.0
    %1235 = vmatpush1.msra.mxu0 0.0
    %1236 = vmatprep.subr.mxu0 0.0
    %1237 = vmatpush1.msra.mxu0 0.0
    %1238 = vmatprep.mubr.f32.mxu0 0.0
    %1239 = vmatmul.mubr.f32.gmra.mrb[0].mxu0 %v1172
    %v1240 = vpop.f32.mrb[0].mxu0
    %v1241 = vadd.f32 0.0, %v1240
    %v1242 = vpop.f32.mrb[0].mxu0
    %1243 = vmatprep.mubr.f32.mxu0 0.0
    %1244 = vmatmul.mubr.f32.gmra.mrb[0].mxu0 %v1173
    %v1245 = vpop.f32.mrb[0].mxu0
    %v1246 = vadd.f32 0.0, %v1245
    %v1247 = vpop.f32.mrb[0].mxu0
    %1248 = vdwg.mxu0
    %v1249 = vxor.u32 %v1241, 2147483648
    %v1250 = vxor.u32 %v1246, 2147483648
    %v1251 = vmul.f32 %v1249, 1.442695
    %v1252 = vpow.pop %v1251
    %v1253 = vmul.f32 %v1250, 1.442695
    %v1254 = vpow.pop %v1253
    %v1255 = vadd.f32 %v1252, 1.0
    %v1256 = vadd.f32 %v1254, 1.0
    %v1257 = vrcp.pop %v1255
    %v1258 = vmul.f32 1.0, %v1257
    %v1259 = vrcp.pop %v1256
    %v1260 = vmul.f32 1.0, %v1259
    %v1261 = vxor.u32 %v1142, 2147483648
    %v1262 = vxor.u32 %v1147, 2147483648
    %v1263 = vmul.f32 %v1261, 1.442695
    %v1264 = vpow.pop %v1263
    %v1265 = vmul.f32 %v1262, 1.442695
    %v1266 = vpow.pop %v1265
    %v1267 = vadd.f32 %v1264, 1.0
    %v1268 = vadd.f32 %v1266, 1.0
    %v1269 = vrcp.pop %v1267
    %v1270 = vmul.f32 1.0, %v1269
    %v1271 = vrcp.pop %v1268
    %v1272 = vmul.f32 1.0, %v1271
    %v1273 = vstv %s880
    %v1274 = vmul.f32 %v1258, %v1273
    %v1275 = vmul.f32 %v1260, %v1273
    %v1276 = vstv %s881
    %v1277 = vmul.f32 %v1270, %v1276
    %v1278 = vmul.f32 %v1272, %v1276
    %v1279 = vadd.f32 %v1274, %v1277
    %v1280 = vadd.f32 %v1275, %v1278
    %v1281 = vmul.f32 %v1279, 0.5
    %v1282 = vmul.f32 %v1280, 0.5
    %v1283 = vstv %s882
    %v1284 = vmul.f32 %v1258, %v1283
    %v1285 = vmul.f32 %v1260, %v1283
    %v1286 = vstv %s883
    %v1287 = vmul.f32 %v1270, %v1286
    %v1288 = vmul.f32 %v1272, %v1286
    %v1289 = vadd.f32 %v1284, %v1287
    %v1290 = vadd.f32 %v1285, %v1288
    %v1291 = vmul.f32 %v1289, 0.5
    %v1292 = vmul.f32 %v1290, 0.5
    %v1293 = vmax.f32 %v1281, %v1291
    %v1294 = vmax.f32 %v1282, %v1292
    %v1295 = vsub.f32 %v1281, %v1293
    %v1296 = vsub.f32 %v1282, %v1294
    %v1297 = vmul.f32 %v1295, 1.442695
    %v1298 = vpow.pop %v1297
    %v1299 = vmul.f32 %v1296, 1.442695
    %v1300 = vpow.pop %v1299
    %v1301 = vsub.f32 %v1291, %v1293
    %v1302 = vsub.f32 %v1292, %v1294
    %v1303 = vmul.f32 %v1301, 1.442695
    %v1304 = vpow.pop %v1303
    %v1305 = vmul.f32 %v1302, 1.442695
    %v1306 = vpow.pop %v1305
    %v1307 = vadd.f32 %v1298, %v1304
    %v1308 = vadd.f32 %v1300, %v1306
    %v1309 = vrcp.pop %v1307
    %v1310 = vrcp.pop %v1308
    %v1311 = vmul.f32 %v1298, %v1309
    %v1312 = vmul.f32 %v1300, %v1310
    %1314 = vset.pattern.permute.xlu0 32
    %1315 = vperm.xlu0 %1314, %v1311
    %v1316 = vpop.permute.xlu0 %1315
    %1319 = vset.pattern.permute.xlu0 32
    %1320 = vperm.xlu0 %1319, %v1312
    %v1321 = vpop.permute.xlu0 %1320
    %v1323 = vmul.f32 %v1316, %v1241
    %v1324 = vmul.f32 %v1321, %v1246
    %v1325 = vmul.f32 %v1304, %v1309
    %v1326 = vmul.f32 %v1306, %v1310
    %1328 = vset.pattern.permute.xlu0 32
    %1329 = vperm.xlu0 %1328, %v1325
    %v1330 = vpop.permute.xlu0 %1329
    %1333 = vset.pattern.permute.xlu0 32
    %1334 = vperm.xlu0 %1333, %v1326
    %v1335 = vpop.permute.xlu0 %1334
    %v1337 = vmul.f32 %v1330, %v1142
    %v1338 = vmul.f32 %v1335, %v1147
    %v1339 = vadd.f32 %v1323, %v1337
    %v1340 = vadd.f32 %v1324, %v1338
    %v1341 = vmax.f32 %v1339, 0.0
    %v1342 = vmax.f32 %v1340, 0.0
    %v1343 = vld [vmem:[%s9] sm:$0xf]
    %v1344 = vunpack.c.l.bf16 %v1343
    %s1345 = sld [smem:[#allocation17 + $0x8]]
    %s1346 = sld [smem:[#allocation17 + $0x9]]
    %s1347 = sld [smem:[#allocation17 + $0xa]]
    %s1348 = sld [smem:[#allocation17 + $0xb]]
    %v1349 = vld [vmem:[#allocation14] sm:$0xff]
    %v1350 = vld [vmem:[#allocation14 + $0x8] sm:$0xff]
    %v1351 = vld [vmem:[#allocation14 + $0x10] sm:$0xff]
    %v1352 = vld [vmem:[#allocation14 + $0x18] sm:$0xff]
    %v1353 = vld [vmem:[#allocation14 + $0x20] sm:$0xff]
    %v1354 = vld [vmem:[#allocation14 + $0x28] sm:$0xff]
    %v1355 = vld [vmem:[#allocation14 + $0x30] sm:$0xff]
    %v1356 = vld [vmem:[#allocation14 + $0x38] sm:$0xff]
    %v1357 = vld [vmem:[#allocation14 + $0x40] sm:$0xff]
    %v1358 = vld [vmem:[#allocation14 + $0x48] sm:$0xff]
    %v1359 = vld [vmem:[#allocation14 + $0x50] sm:$0xff]
    %v1360 = vld [vmem:[#allocation14 + $0x58] sm:$0xff]
    %v1361 = vld [vmem:[#allocation14 + $0x60] sm:$0xff]
    %v1362 = vld [vmem:[#allocation14 + $0x68] sm:$0xff]
    %v1363 = vld [vmem:[#allocation14 + $0x70] sm:$0xff]
    %v1364 = vld [vmem:[#allocation14 + $0x78] sm:$0xff]
    %v1365 = vld [vmem:[%s11] sm:$0x1]
    %v1366 = vld [vmem:[#allocation15] sm:$0xff]
    %v1367 = vld [vmem:[#allocation15 + $0x8] sm:$0xff]
    %v1368 = vld [vmem:[#allocation15 + $0x10] sm:$0xff]
    %v1369 = vld [vmem:[#allocation15 + $0x18] sm:$0xff]
    %v1370 = vld [vmem:[#allocation15 + $0x20] sm:$0xff]
    %v1371 = vld [vmem:[#allocation15 + $0x28] sm:$0xff]
    %v1372 = vld [vmem:[#allocation15 + $0x30] sm:$0xff]
    %v1373 = vld [vmem:[#allocation15 + $0x38] sm:$0xff]
    %v1374 = vld [vmem:[#allocation15 + $0x40] sm:$0xff]
    %v1375 = vld [vmem:[#allocation15 + $0x48] sm:$0xff]
    %v1376 = vld [vmem:[#allocation15 + $0x50] sm:$0xff]
    %v1377 = vld [vmem:[#allocation15 + $0x58] sm:$0xff]
    %v1378 = vld [vmem:[#allocation15 + $0x60] sm:$0xff]
    %v1379 = vld [vmem:[#allocation15 + $0x68] sm:$0xff]
    %v1380 = vld [vmem:[#allocation15 + $0x70] sm:$0xff]
    %v1381 = vld [vmem:[#allocation15 + $0x78] sm:$0xff]
    %1382 = vmatprep.subr.mxu0 0.0
    %1383 = vmatpush1.msra.mxu0 %v1349
    %1384 = vmatprep.subr.mxu0 0.0
    %1385 = vmatpush1.msra.mxu0 %v1350
    %1386 = vmatprep.subr.mxu0 0.0
    %1387 = vmatpush1.msra.mxu0 %v1351
    %1388 = vmatprep.subr.mxu0 0.0
    %1389 = vmatpush1.msra.mxu0 %v1352
    %1390 = vmatprep.subr.mxu0 0.0
    %1391 = vmatpush1.msra.mxu0 %v1353
    %1392 = vmatprep.subr.mxu0 0.0
    %1393 = vmatpush1.msra.mxu0 %v1354
    %1394 = vmatprep.subr.mxu0 0.0
    %1395 = vmatpush1.msra.mxu0 %v1355
    %1396 = vmatprep.subr.mxu0 0.0
    %1397 = vmatpush1.msra.mxu0 %v1356
    %1398 = vmatprep.subr.mxu0 0.0
    %1399 = vmatpush1.msra.mxu0 %v1357
    %1400 = vmatprep.subr.mxu0 0.0
    %1401 = vmatpush1.msra.mxu0 %v1358
    %1402 = vmatprep.subr.mxu0 0.0
    %1403 = vmatpush1.msra.mxu0 %v1359
    %1404 = vmatprep.subr.mxu0 0.0
    %1405 = vmatpush1.msra.mxu0 %v1360
    %1406 = vmatprep.subr.mxu0 0.0
    %1407 = vmatpush1.msra.mxu0 %v1361
    %1408 = vmatprep.subr.mxu0 0.0
    %1409 = vmatpush1.msra.mxu0 %v1362
    %1410 = vmatprep.subr.mxu0 0.0
    %1411 = vmatpush1.msra.mxu0 %v1363
    %1412 = vmatprep.subr.mxu0 0.0
    %1413 = vmatpush1.msra.mxu0 %v1364
    %1414 = vmatprep.subr.mxu0 0.0
    %1415 = vmatpush1.msra.mxu0 0.0
    %1416 = vmatprep.subr.mxu0 0.0
    %1417 = vmatpush1.msra.mxu0 0.0
    %1418 = vmatprep.subr.mxu0 0.0
    %1419 = vmatpush1.msra.mxu0 0.0
    %1420 = vmatprep.subr.mxu0 0.0
    %1421 = vmatpush1.msra.mxu0 0.0
    %1422 = vmatprep.subr.mxu0 0.0
    %1423 = vmatpush1.msra.mxu0 0.0
    %1424 = vmatprep.subr.mxu0 0.0
    %1425 = vmatpush1.msra.mxu0 0.0
    %1426 = vmatprep.subr.mxu0 0.0
    %1427 = vmatpush1.msra.mxu0 0.0
    %1428 = vmatprep.subr.mxu0 0.0
    %1429 = vmatpush1.msra.mxu0 0.0
    %1430 = vmatprep.subr.mxu0 0.0
    %1431 = vmatpush1.msra.mxu0 0.0
    %1432 = vmatprep.subr.mxu0 0.0
    %1433 = vmatpush1.msra.mxu0 0.0
    %1434 = vmatprep.subr.mxu0 0.0
    %1435 = vmatpush1.msra.mxu0 0.0
    %1436 = vmatprep.subr.mxu0 0.0
    %1437 = vmatpush1.msra.mxu0 0.0
    %1438 = vmatprep.subr.mxu0 0.0
    %1439 = vmatpush1.msra.mxu0 0.0
    %1440 = vmatprep.subr.mxu0 0.0
    %1441 = vmatpush1.msra.mxu0 0.0
    %1442 = vmatprep.subr.mxu0 0.0
    %1443 = vmatpush1.msra.mxu0 0.0
    %1444 = vmatprep.subr.mxu0 0.0
    %1445 = vmatpush1.msra.mxu0 0.0
    %1446 = vmatprep.mubr.f32.mxu0 0.0
    %1447 = vmatmul.mubr.f32.gmra.mrb[0].mxu0 %v1341
    %v1448 = vpop.f32.mrb[0].mxu0
    %v1449 = vadd.f32 0.0, %v1448
    %v1450 = vpop.f32.mrb[0].mxu0
    %1451 = vmatprep.mubr.f32.mxu0 0.0
    %1452 = vmatmul.mubr.f32.gmra.mrb[0].mxu0 %v1342
    %v1453 = vpop.f32.mrb[0].mxu0
    %v1454 = vadd.f32 0.0, %v1453
    %v1455 = vpop.f32.mrb[0].mxu0
    %1456 = vdwg.mxu0
    %v1458 = vlaneseq
    %v1459 = vshrl.u32 %v1458, 7
    %v1460 = vsub.s32 0, %v1459
    %v1461 = vrot.slane %v1365, %v1460
    %v1463 = vadd.f32 %v1449, %v1461
    %v1464 = vadd.f32 %v1454, %v1461
    %v1465 = vtanh.pop %v1463
    %v1466 = vtanh.pop %v1464
    %v1467 = vand.u32 2147483647, %v1465
    %v1468 = vand.u32 2147483647, %v1466
    %vm1469 = vcmp.gt.f32.partialorder %v1467, 0.0
    %vm1470 = vcmp.gt.f32.partialorder %v1468, 0.0
    %v1471 = vlog2.pop %v1467
    %v1472 = vmul.f32 %v1471, 0.6931472
    %v1473 = vlog2.pop %v1468
    %v1474 = vmul.f32 %v1473, 0.6931472
    %v1475 = vsel %vm1469, %v1472, -1e+30
    %v1476 = vsel %vm1470, %v1474, -1e+30
    %vm1477 = vcmp.lt.f32.partialorder %v1465, 0.0
    %vm1478 = vcmp.lt.f32.partialorder %v1466, 0.0
    %v1479 = vsel %vm1477, 1, 0
    %v1480 = vsel %vm1478, 1, 0
    %v1481 = vcvt.s32.f32 %v1479
    %v1482 = vcvt.s32.f32 %v1480
    %1483 = vrot.lane.b32.xlu0 %v1481, 8
    %v1484 = vpop.permute.xlu0 %1483
    %1485 = vrot.lane.b32.xlu0 %v1482, 8
    %v1486 = vpop.permute.xlu0 %1485
    %vm1487 = vcmp.lt.s32.totalorder %v431, 9
    %vm1488 = vcmp.lt.s32.totalorder %v431, 17
    %vm1489 = vcmp.lt.s32.totalorder %v431, 25
    %v1490 = vsel %vm1489, %v1484, 0.0
    %v1491 = vsel %vm1489, %v1486, 0.0
    %v1492 = vsel %vm1488, %v1475, %v1490
    %v1493 = vsel %vm1488, %v1476, %v1491
    %v1494 = vsel %vm1487, %v1449, %v1492
    %v1495 = vsel %vm1487, %v1454, %v1493
    %vm1496 = vcmask 130048
    %v1498 = vsel %vm1496, %v1344, 0
    %1500 = vmatprep.subr.mxu0 0.0
    %1501 = vmatpush1.msra.mxu0 %v1494
    %1502 = vmatprep.subr.mxu0 0.0
    %1503 = vmatpush1.msra.mxu0 %v1495
    %1504 = vmatprep.subr.mxu0 0.0
    %1505 = vmatpush1.msra.mxu0 0.0
    %1506 = vmatprep.subr.mxu0 0.0
    %1507 = vmatpush1.msra.mxu0 0.0
    %1508 = vmatprep.subr.mxu0 0.0
    %1509 = vmatpush1.msra.mxu0 0.0
    %1510 = vmatprep.subr.mxu0 0.0
    %1511 = vmatpush1.msra.mxu0 0.0
    %1512 = vmatprep.subr.mxu0 0.0
    %1513 = vmatpush1.msra.mxu0 0.0
    %1514 = vmatprep.subr.mxu0 0.0
    %1515 = vmatpush1.msra.mxu0 0.0
    %1516 = vmatprep.subr.mxu0 0.0
    %1517 = vmatpush1.msra.mxu0 0.0
    %1518 = vmatprep.subr.mxu0 0.0
    %1519 = vmatpush1.msra.mxu0 0.0
    %1520 = vmatprep.subr.mxu0 0.0
    %1521 = vmatpush1.msra.mxu0 0.0
    %1522 = vmatprep.subr.mxu0 0.0
    %1523 = vmatpush1.msra.mxu0 0.0
    %1524 = vmatprep.subr.mxu0 0.0
    %1525 = vmatpush1.msra.mxu0 0.0
    %1526 = vmatprep.subr.mxu0 0.0
    %1527 = vmatpush1.msra.mxu0 0.0
    %1528 = vmatprep.subr.mxu0 0.0
    %1529 = vmatpush1.msra.mxu0 0.0
    %1530 = vmatprep.subr.mxu0 0.0
    %1531 = vmatpush1.msra.mxu0 0.0
    %1532 = vmatprep.subr.mxu0 0.0
    %1533 = vmatpush1.msra.mxu0 0.0
    %1534 = vmatprep.subr.mxu0 0.0
    %1535 = vmatpush1.msra.mxu0 0.0
    %1536 = vmatprep.subr.mxu0 0.0
    %1537 = vmatpush1.msra.mxu0 0.0
    %1538 = vmatprep.subr.mxu0 0.0
    %1539 = vmatpush1.msra.mxu0 0.0
    %1540 = vmatprep.subr.mxu0 0.0
    %1541 = vmatpush1.msra.mxu0 0.0
    %1542 = vmatprep.subr.mxu0 0.0
    %1543 = vmatpush1.msra.mxu0 0.0
    %1544 = vmatprep.subr.mxu0 0.0
    %1545 = vmatpush1.msra.mxu0 0.0
    %1546 = vmatprep.subr.mxu0 0.0
    %1547 = vmatpush1.msra.mxu0 0.0
    %1548 = vmatprep.subr.mxu0 0.0
    %1549 = vmatpush1.msra.mxu0 0.0
    %1550 = vmatprep.subr.mxu0 0.0
    %1551 = vmatpush1.msra.mxu0 0.0
    %1552 = vmatprep.subr.mxu0 0.0
    %1553 = vmatpush1.msra.mxu0 0.0
    %1554 = vmatprep.subr.mxu0 0.0
    %1555 = vmatpush1.msra.mxu0 0.0
    %1556 = vmatprep.subr.mxu0 0.0
    %1557 = vmatpush1.msra.mxu0 0.0
    %1558 = vmatprep.subr.mxu0 0.0
    %1559 = vmatpush1.msra.mxu0 0.0
    %1560 = vmatprep.subr.mxu0 0.0
    %1561 = vmatpush1.msra.mxu0 0.0
    %1562 = vmatprep.subr.mxu0 0.0
    %1563 = vmatpush1.msra.mxu0 0.0
    %1564 = vmatprep.mubr.f32.mxu0 0.0
    %1565 = vmatmul.mubr.f32.gmra.mrb[0].mxu0 %v1498
    %v1566 = vpop.f32.mrb[0].mxu0
    %v1567 = vadd.f32 0.0, %v1566
    %v1568 = vpop.f32.mrb[0].mxu0
    %1569 = vdwg.mxu0
    %vm1570 = vcmp.ge.s32.totalorder %v431, 9
    %vm1571 = vmand %vm1570, %vm1488
    %1572 = vrot.lane.b32.xlu0 %v1567, 120
    %v1573 = vpop.permute.xlu0 %1572
    %v1574 = vmul.f32 %v1573, 0.5
    %v1575 = vfloor.f32 %v1574
    %v1576 = vmul.f32 %v1575, 2.0
    %v1577 = vsub.f32 %v1573, %v1576
    %v1578 = vmul.f32 %v1577, 2.0
    %v1579 = vsub.f32 1.0, %v1578
    %v1580 = vsel %vm1571, %v1567, -1e+30
    %v1581 = vmul.f32 %v1580, 1.442695
    %v1582 = vpow.pop %v1581
    %v1583 = vmul.f32 %v1579, %v1582
    %1584 = vmatprep.subr.mxu0 0.0
    %1585 = vmatpush1.msra.mxu0 %v1366
    %1586 = vmatprep.subr.mxu0 0.0
    %1587 = vmatpush1.msra.mxu0 %v1367
    %1588 = vmatprep.subr.mxu0 0.0
    %1589 = vmatpush1.msra.mxu0 %v1368
    %1590 = vmatprep.subr.mxu0 0.0
    %1591 = vmatpush1.msra.mxu0 %v1369
    %1592 = vmatprep.subr.mxu0 0.0
    %1593 = vmatpush1.msra.mxu0 %v1370
    %1594 = vmatprep.subr.mxu0 0.0
    %1595 = vmatpush1.msra.mxu0 %v1371
    %1596 = vmatprep.subr.mxu0 0.0
    %1597 = vmatpush1.msra.mxu0 %v1372
    %1598 = vmatprep.subr.mxu0 0.0
    %1599 = vmatpush1.msra.mxu0 %v1373
    %1600 = vmatprep.subr.mxu0 0.0
    %1601 = vmatpush1.msra.mxu0 %v1374
    %1602 = vmatprep.subr.mxu0 0.0
    %1603 = vmatpush1.msra.mxu0 %v1375
    %1604 = vmatprep.subr.mxu0 0.0
    %1605 = vmatpush1.msra.mxu0 %v1376
    %1606 = vmatprep.subr.mxu0 0.0
    %1607 = vmatpush1.msra.mxu0 %v1377
    %1608 = vmatprep.subr.mxu0 0.0
    %1609 = vmatpush1.msra.mxu0 %v1378
    %1610 = vmatprep.subr.mxu0 0.0
    %1611 = vmatpush1.msra.mxu0 %v1379
    %1612 = vmatprep.subr.mxu0 0.0
    %1613 = vmatpush1.msra.mxu0 %v1380
    %1614 = vmatprep.subr.mxu0 0.0
    %1615 = vmatpush1.msra.mxu0 %v1381
    %1616 = vmatprep.subr.mxu0 0.0
    %1617 = vmatpush1.msra.mxu0 0.0
    %1618 = vmatprep.subr.mxu0 0.0
    %1619 = vmatpush1.msra.mxu0 0.0
    %1620 = vmatprep.subr.mxu0 0.0
    %1621 = vmatpush1.msra.mxu0 0.0
    %1622 = vmatprep.subr.mxu0 0.0
    %1623 = vmatpush1.msra.mxu0 0.0
    %1624 = vmatprep.subr.mxu0 0.0
    %1625 = vmatpush1.msra.mxu0 0.0
    %1626 = vmatprep.subr.mxu0 0.0
    %1627 = vmatpush1.msra.mxu0 0.0
    %1628 = vmatprep.subr.mxu0 0.0
    %1629 = vmatpush1.msra.mxu0 0.0
    %1630 = vmatprep.subr.mxu0 0.0
    %1631 = vmatpush1.msra.mxu0 0.0
    %1632 = vmatprep.subr.mxu0 0.0
    %1633 = vmatpush1.msra.mxu0 0.0
    %1634 = vmatprep.subr.mxu0 0.0
    %1635 = vmatpush1.msra.mxu0 0.0
    %1636 = vmatprep.subr.mxu0 0.0
    %1637 = vmatpush1.msra.mxu0 0.0
    %1638 = vmatprep.subr.mxu0 0.0
    %1639 = vmatpush1.msra.mxu0 0.0
    %1640 = vmatprep.subr.mxu0 0.0
    %1641 = vmatpush1.msra.mxu0 0.0
    %1642 = vmatprep.subr.mxu0 0.0
    %1643 = vmatpush1.msra.mxu0 0.0
    %1644 = vmatprep.subr.mxu0 0.0
    %1645 = vmatpush1.msra.mxu0 0.0
    %1646 = vmatprep.subr.mxu0 0.0
    %1647 = vmatpush1.msra.mxu0 0.0
    %1648 = vmatprep.mubr.f32.mxu0 0.0
    %1649 = vmatmul.mubr.f32.gmra.mrb[0].mxu0 %v1583
    %v1650 = vpop.f32.mrb[0].mxu0
    %v1651 = vadd.f32 0.0, %v1650
    %v1652 = vpop.f32.mrb[0].mxu0
    %1653 = vdwg.mxu0
    %v1654 = vxor.u32 %v1651, 2147483648
    %v1655 = vmul.f32 %v1654, 1.442695
    %v1656 = vpow.pop %v1655
    %v1657 = vadd.f32 %v1656, 1.0
    %v1658 = vrcp.pop %v1657
    %v1659 = vmul.f32 1.0, %v1658
    %v1660 = vxor.u32 %v1567, 2147483648
    %v1661 = vmul.f32 %v1660, 1.442695
    %v1662 = vpow.pop %v1661
    %v1663 = vadd.f32 %v1662, 1.0
    %v1664 = vrcp.pop %v1663
    %v1665 = vmul.f32 1.0, %v1664
    %v1666 = vstv %s1345
    %v1667 = vmul.f32 %v1659, %v1666
    %v1668 = vstv %s1346
    %v1669 = vmul.f32 %v1665, %v1668
    %v1670 = vadd.f32 %v1667, %v1669
    %v1671 = vmul.f32 %v1670, 0.5
    %v1672 = vstv %s1347
    %v1673 = vmul.f32 %v1659, %v1672
    %v1674 = vstv %s1348
    %v1675 = vmul.f32 %v1665, %v1674
    %v1676 = vadd.f32 %v1673, %v1675
    %v1677 = vmul.f32 %v1676, 0.5
    %v1678 = vmax.f32 %v1671, %v1677
    %v1679 = vsub.f32 %v1671, %v1678
    %v1680 = vmul.f32 %v1679, 1.442695
    %v1681 = vpow.pop %v1680
    %v1682 = vsub.f32 %v1677, %v1678
    %v1683 = vmul.f32 %v1682, 1.442695
    %v1684 = vpow.pop %v1683
    %v1685 = vadd.f32 %v1681, %v1684
    %v1686 = vrcp.pop %v1685
    %v1687 = vmul.f32 %v1681, %v1686
    %1689 = vset.pattern.permute.xlu0 8
    %1690 = vperm.xlu0 %1689, %v1687
    %v1691 = vpop.permute.xlu0 %1690
    %v1693 = vmul.f32 %v1691, %v1651
    %v1694 = vmul.f32 %v1684, %v1686
    %1696 = vset.pattern.permute.xlu0 8
    %1697 = vperm.xlu0 %1696, %v1694
    %v1698 = vpop.permute.xlu0 %1697
    %v1700 = vmul.f32 %v1698, %v1567
    %v1701 = vadd.f32 %v1693, %v1700
    %1702 = vst [vmem:[#allocation18] sm:$0xff] %v1701
    // Predicated region
    $region94: #{tpu_custom_call.1} parent=1 // pred_check
      _
    $region95: #{tpu_custom_call.1} parent=1 // pred_check_branch
      %1704 = sbr.rel (0) target = $region97
    $region96: #{tpu_custom_call.1} parent=1 // pred_region
      %s1706 = ssub.s32 128, 128
      %1707 = vsyncadd [#allocation4], %s1706
      %s1709 = sshll.u32 [#allocation18], 4
      %s1710 = int_to_ptr.vmem [resolvable:$true] %s1709
      %1712 = dma.vmem_to_hbm [thread:$0]  %s1710, 128, %s14, [#allocation4]
    $region97: #{tpu_custom_call.1} parent=1 // pred_fallthru
      _
    // Predicated region
    $region98: #{tpu_custom_call.1} parent=1 // pred_check
      _
    $region99: #{tpu_custom_call.1} parent=1 // pred_check_branch
      %1714 = sbr.rel (0) target = $region101
    $region100: #{tpu_custom_call.1} parent=1 // pred_region
      %1715 = dma.done [#allocation4], 128
    $region101: #{tpu_custom_call.1} parent=1 // pred_fallthru
      _
    %1716 = vsyncpa [#allocation3], 1
    %1717 = vsyncpa [#allocation7], 1
    %1718 = vsyncpa [#allocation10], 1
    %1719 = vsyncpa [#allocation13], 1
    %1720 = vsyncpa [#allocation16], 1
    %1721 = vsyncpa [#allocation4], 1
    %1722 = vsyncpa [#allocation5], 1

</llo_original>
